<compile_context>
chip_gen: v6e
topology: v6e:2x2x1
jax: 0.10.0
libtpu: 0.0.40
codegen_flags: <defaults>
</compile_context>

<pallas_src>
import jax
import jax.numpy as jnp
from jax.experimental import pallas as pl
from jax.experimental.pallas import tpu as pltpu

HIDDEN = 128      # module default hidden_size
OUT_DIM = 2       # module default output_dim
OUT_PAD = 128     # lane-padded output width inside the kernel
LN_EPS = 1e-5
BN_EPS = 1e-5
SUBLANE = 8       # f32 sublane count


# ----------------------------------------------------------------------------
# Fused kernel: no grid; everything resident in VMEM.
# ----------------------------------------------------------------------------
def _emoreact_kernel(
    x_ref,                             # (T*Bp, Dp)   lane-padded concat(x_l|x_a|x_v)
    wih_ref,                           # (Dp, 12H)    block-structured, gate order [i,f,o,g]
    whhl_ref, whha_ref, whhv_ref,      # (H, 4H)      gate order [i,f,o,g]
    b_ref,                             # (1, 12H)     b_ih + b_hh folded, all modalities
    lng_ref, lnb_ref,                  # (3, 1, H)    LayerNorm gamma/beta per modality
    w1_ref, b1_ref,                    # (3H, 128), (1, 128)          bn1 folded
    w2_ref, b2_ref,                    # (128, OUT_PAD), (1, OUT_PAD) bn2 folded + padded
    w3_ref, b3_ref,                    # (OUT_PAD, OUT_PAD), (1, OUT_PAD) padded
    out_ref,                           # (Bp, OUT_PAD)
    gx_scr,                            # (T*Bp, 12H)  hoisted input projections
):
    Bp = out_ref.shape[0]
    H = whhl_ref.shape[0]
    H3, H4 = 3 * H, 4 * H
    T = gx_scr.shape[0] // Bp

    # ---- hoisted, fused input projection: tanh(x) @ W_ih + bias for ALL T / modalities
    # (one full-lane tanh, one matmul, one bias add, one scratch store stream).
    gx_scr[...] = (jnp.dot(jnp.tanh(x_ref[...]), wih_ref[...],
                           preferred_element_type=jnp.float32) + b_ref[...])

    def lstm_cell(gx, h, c, whh_ref):
        gates = gx + jnp.dot(h, whh_ref[...], preferred_element_type=jnp.float32)
        # gate order [i, f, o, g]; sigmoid(x) = 0.5*tanh(0.5*x) + 0.5
        # -> one EUP op on the (Bp, 3H) slab + one tanh on g (2 transcendental issues).
        ifo = 0.5 * jnp.tanh(0.5 * gates[:, :H3]) + 0.5
        g = jnp.tanh(gates[:, H3:])
        i, f, o = ifo[:, :H], ifo[:, H:2 * H], ifo[:, 2 * H:]
        c_new = f * c + i * g
        h_new = o * jnp.tanh(c_new)
        return h_new, c_new

    zeros = jnp.zeros((Bp, H), jnp.float32)

    # ---- recurrence: rolled loop caps vreg live ranges; the 3 modality chains stay
    # interleaved inside the body so their MXU/EUP work overlaps.
    def step(t, carry):
        h_l, c_l, h_a, c_a, h_v, c_v = carry
        row = pl.multiple_of(t * Bp, SUBLANE)
        gx = gx_scr[pl.ds(row, Bp), :]                       # (Bp, 12H)
        h_l, c_l = lstm_cell(gx[:, 0 * H4:1 * H4], h_l, c_l, whhl_ref)
        h_a, c_a = lstm_cell(gx[:, 1 * H4:2 * H4], h_a, c_a, whha_ref)
        h_v, c_v = lstm_cell(gx[:, 2 * H4:3 * H4], h_v, c_v, whhv_ref)
        return (h_l, c_l, h_a, c_a, h_v, c_v)

    h_l, _, h_a, _, h_v, _ = jax.lax.fori_loop(
        0, T, step, (zeros, zeros, zeros, zeros, zeros, zeros))

    # ---- per-modality LayerNorm (biased variance, eps=1e-5)
    def layer_norm(h, g, b):
        m = jnp.mean(h, axis=-1, keepdims=True)
        v = jnp.mean((h - m) ** 2, axis=-1, keepdims=True)
        return (h - m) * jax.lax.rsqrt(v + LN_EPS) * g + b

    hn_l = layer_norm(h_l, lng_ref[0], lnb_ref[0])
    hn_a = layer_norm(h_a, lng_ref[1], lnb_ref[1])
    hn_v = layer_norm(h_v, lng_ref[2], lnb_ref[2])

    # ---- fc1 (+ folded bn1) + relu: lane-concat (128-aligned, free) + ONE matmul.
    fused = jnp.concatenate([hn_l, hn_a, hn_v], axis=-1)      # (Bp, 3H)
    x = jnp.dot(fused, w1_ref[...], preferred_element_type=jnp.float32) + b1_ref[...]
    x = jnp.maximum(x, 0.0)
    # dropout(p=0.3): identity in eval mode
    x = jnp.maximum(jnp.dot(x, w2_ref[...], preferred_element_type=jnp.float32)
                    + b2_ref[...], 0.0)                       # fc2 + folded bn2 + relu
    # dropout(p=0.3): identity in eval mode
    out_ref[...] = (jnp.dot(x, w3_ref[...], preferred_element_type=jnp.float32)
                    + b3_ref[...])                            # fc3 (lane-padded output)


# ----------------------------------------------------------------------------
# Wrapper: pad batch to sublane width + features to lane width, run one
# pallas_call, slice the output back.
# ----------------------------------------------------------------------------
def emoreact_forward(x_l, x_a, x_v, params):
    T, B, _ = x_l.shape
    Bp = max(SUBLANE, ((B + SUBLANE - 1) // SUBLANE) * SUBLANE)
    Dp = params["wih"].shape[0]
    H12 = params["wih"].shape[1]

    x = jnp.concatenate([x_l, x_a, x_v], axis=-1).astype(jnp.float32)   # (T, B, D)
    D = x.shape[-1]
    xp = (jnp.zeros((T, Bp, Dp), jnp.float32)
          .at[:, :B, :D].set(x)
          .reshape(T * Bp, Dp))                                         # one dense slab

    vmem = pl.BlockSpec(memory_space=pltpu.MemorySpace.VMEM)
    p = params
    args = (
        xp,
        p["wih"], p["whh_l"], p["whh_a"], p["whh_v"], p["b_ih"],
        p["ln_g"], p["ln_b"],
        p["w1"], p["b1"], p["w2"], p["b2"], p["w3"], p["b3"],
    )
    out = pl.pallas_call(
        _emoreact_kernel,
        out_shape=jax.ShapeDtypeStruct((Bp, OUT_PAD), jnp.float32),
        in_specs=[vmem] * len(args),
        out_specs=vmem,
        scratch_shapes=[pltpu.VMEM((T * Bp, H12), jnp.float32)],
    )(*args)
    # TODO(synk): on v7x (2 TensorCores) the three modality recurrences could be
    # sharded across cores via pl.core_map + VMEM_SHARED handoff; kept single-core
    # here because the whole kernel is a few microseconds and the barrier cost
    # would need measuring.
    # TODO(synk): if real workloads ever have B >> 8, add a batch grid with
    # constant-index_map weight BlockSpecs so weights stay VMEM-resident.
    return out[:B, :OUT_DIM]


# ----------------------------------------------------------------------------
# Parameter construction (deterministic synthetic init mirroring module __init__)
# ----------------------------------------------------------------------------
def _xavier_uniform(key, shape):
    fan_out, fan_in = shape
    bound = jnp.sqrt(6.0 / (fan_in + fan_out))
    return jax.random.uniform(key, shape, jnp.float32, -bound, bound)


def _lstm_params(key, d_in, H):
    k1, k2, k3, k4 = jax.random.split(key, 4)
    bound = 1.0 / jnp.sqrt(H * 1.0)
    w_ih = jax.random.uniform(k1, (4 * H, d_in), jnp.float32, -bound, bound)
    w_hh = jax.random.uniform(k2, (4 * H, H), jnp.float32, -bound, bound)
    b_ih = jax.random.uniform(k3, (4 * H,), jnp.float32, -bound, bound)
    b_hh = jax.random.uniform(k4, (4 * H,), jnp.float32, -bound, bound)

    # PyTorch gate order along the leading 4H axis is [i, f, g, o].
    # Permute to [i, f, o, g] so the kernel can apply one sigmoid to a 3H slab.
    def perm(w):
        return jnp.concatenate([w[0 * H:2 * H], w[3 * H:4 * H], w[2 * H:3 * H]], axis=0)

    w_ih_p = perm(w_ih).T                                     # (d_in, 4H)
    w_hh_p = perm(w_hh).T                                     # (H, 4H)
    b = perm((b_ih + b_hh).reshape(4 * H, 1)).reshape(1, 4 * H)
    return w_ih_p, w_hh_p, b


def make_params(key, d_l, d_a, d_v, H=HIDDEN, out_dim=OUT_DIM):
    keys = jax.random.split(key, 6)
    wih_l, whh_l, b_l = _lstm_params(keys[0], d_l, H)
    wih_a, whh_a, b_a = _lstm_params(keys[1], d_a, H)
    wih_v, whh_v, b_v = _lstm_params(keys[2], d_v, H)

    # ---- pack the three input projections into one block-structured weight.
    D = d_l + d_a + d_v
    Dp = max(128, ((D + 127) // 128) * 128)
    H4 = 4 * H
    wih = jnp.zeros((Dp, 3 * H4), jnp.float32)
    wih = wih.at[:d_l, 0 * H4:1 * H4].set(wih_l)
    wih = wih.at[d_l:d_l + d_a, 1 * H4:2 * H4].set(wih_a)
    wih = wih.at[d_l + d_a:D, 2 * H4:3 * H4].set(wih_v)
    b_ih = jnp.concatenate([b_l, b_a, b_v], axis=1)           # (1, 12H)

    # LayerNorm defaults: gamma=1, beta=0 (leading axis: l, a, v)
    ln_g = jnp.ones((3, 1, H), jnp.float32)
    ln_b = jnp.zeros((3, 1, H), jnp.float32)

    # Linear layers: xavier_uniform weights, zero bias (as in _init_weights)
    w1 = _xavier_uniform(keys[3], (128, 3 * H)).T             # (3H, 128)
    w2 = _xavier_uniform(keys[4], (64, 128)).T                # (128, 64)
    w3 = _xavier_uniform(keys[5], (out_dim, 64)).T            # (64, out_dim)
    b1 = jnp.zeros((128,), jnp.float32)
    b2 = jnp.zeros((64,), jnp.float32)
    b3 = jnp.zeros((out_dim,), jnp.float32)

    # BatchNorm1d (eval): gamma=1, beta=0, running_mean=0, running_var=1
    def bn_affine(n):
        gamma = jnp.ones((n,), jnp.float32)
        beta = jnp.zeros((n,), jnp.float32)
        mean = jnp.zeros((n,), jnp.float32)
        var = jnp.ones((n,), jnp.float32)
        scale = gamma / jnp.sqrt(var + BN_EPS)
        shift = beta - mean * scale
        return scale, shift

    s1, sh1 = bn_affine(128)
    s2, sh2 = bn_affine(64)

    # Fold eval-mode BN affines into fc1/fc2; lane-pad narrow outputs to OUT_PAD.
    w1_f = w1 * s1[None, :]                                   # (3H, 128)
    b1_f = (b1 * s1 + sh1).reshape(1, 128)

    w2_p = jnp.zeros((128, OUT_PAD), jnp.float32).at[:, :64].set(w2 * s2[None, :])
    b2_p = jnp.zeros((1, OUT_PAD), jnp.float32).at[0, :64].set(b2 * s2 + sh2)

    w3_p = jnp.zeros((OUT_PAD, OUT_PAD), jnp.float32).at[:64, :out_dim].set(w3)
    b3_p = jnp.zeros((1, OUT_PAD), jnp.float32).at[0, :out_dim].set(b3)

    return {
        "wih": wih, "b_ih": b_ih,
        "whh_l": whh_l, "whh_a": whh_a, "whh_v": whh_v,
        "ln_g": ln_g, "ln_b": ln_b,
        "w1": w1_f, "b1": b1_f,
        "w2": w2_p, "b2": b2_p,
        "w3": w3_p, "b3": b3_p,
    }


if __name__ == "__main__":
    key = jax.random.PRNGKey(0)
    T, B = 8, 2
    d_l, d_a, d_v = 32, 8, 16

    k_params, k_l, k_a, k_v = jax.random.split(key, 4)
    params = make_params(k_params, d_l, d_a, d_v)

    x_l = jax.random.normal(k_l, (T, B, d_l), jnp.float32)
    x_a = jax.random.normal(k_a, (T, B, d_a), jnp.float32)
    x_v = jax.random.normal(k_v, (T, B, d_v), jnp.float32)

    out = jax.jit(emoreact_forward)(x_l, x_a, x_v, params)
    jax.block_until_ready(out)
    assert out.shape == (B, OUT_DIM)
    print("KERNEL_OK")
</pallas_src>

<mosaic_0001>
module attributes {stable_mosaic.version = 11 : i64} {
  func.func @_emoreact_kernel(%arg0: memref<64x128xf32, #tpu.memory_space<vmem>>, %arg1: memref<128x1536xf32, #tpu.memory_space<vmem>>, %arg2: memref<128x512xf32, #tpu.memory_space<vmem>>, %arg3: memref<128x512xf32, #tpu.memory_space<vmem>>, %arg4: memref<128x512xf32, #tpu.memory_space<vmem>>, %arg5: memref<1x1536xf32, #tpu.memory_space<vmem>>, %arg6: memref<3x1x128xf32, #tpu.memory_space<vmem>>, %arg7: memref<3x1x128xf32, #tpu.memory_space<vmem>>, %arg8: memref<384x128xf32, #tpu.memory_space<vmem>>, %arg9: memref<1x128xf32, #tpu.memory_space<vmem>>, %arg10: memref<128x128xf32, #tpu.memory_space<vmem>>, %arg11: memref<1x128xf32, #tpu.memory_space<vmem>>, %arg12: memref<128x128xf32, #tpu.memory_space<vmem>>, %arg13: memref<1x128xf32, #tpu.memory_space<vmem>>, %arg14: memref<8x128xf32, #tpu.memory_space<vmem>>, %arg15: memref<64x1536xf32, #tpu.memory_space<vmem>>) attributes {dimension_semantics = [], scalar_prefetch = 0 : i64, scratch_operands = 1 : i64, tpu.core_type = #tpu.core_type<tc>} {
    %c0 = arith.constant 0 : index
    %c0_0 = arith.constant 0 : index
    %0 = vector.load %arg0[%c0, %c0_0] : memref<64x128xf32, #tpu.memory_space<vmem>>, vector<64x128xf32>
    %1 = math.tanh %0 : vector<64x128xf32>
    %c0_1 = arith.constant 0 : index
    %c0_2 = arith.constant 0 : index
    %2 = vector.load %arg1[%c0_1, %c0_2] : memref<128x1536xf32, #tpu.memory_space<vmem>>, vector<128x1536xf32>
    %cst = arith.constant dense<0.000000e+00> : vector<64x1536xf32>
    %3 = tpu.matmul %1, %2, %cst {dimension_numbers = #tpu.dot_dimension_numbers<[1], [0], [0], [1], [0, 0, 1, 1], [], []>} : vector<64x128xf32>, vector<128x1536xf32>, vector<64x1536xf32> -> vector<64x1536xf32>
    %c0_3 = arith.constant 0 : index
    %c0_4 = arith.constant 0 : index
    %4 = vector.load %arg5[%c0_3, %c0_4] : memref<1x1536xf32, #tpu.memory_space<vmem>>, vector<1x1536xf32>
    %5 = vector.broadcast %4 : vector<1x1536xf32> to vector<64x1536xf32>
    %6 = arith.addf %3, %5 : vector<64x1536xf32>
    %c0_5 = arith.constant 0 : index
    %c0_6 = arith.constant 0 : index
    %7 = vector.load %arg15[%c0_5, %c0_6] : memref<64x1536xf32, #tpu.memory_space<vmem>>, vector<64x1536xf32>
    tpu.vector_store %arg15[%c0_5, %c0_6], %6 {strides = array<i32>} : memref<64x1536xf32, #tpu.memory_space<vmem>>, vector<64x1536xf32>,
    %cst_7 = arith.constant 0.000000e+00 : f32
    %8 = vector.broadcast %cst_7 : f32 to vector<8x128xf32>
    %c0_i32 = arith.constant 0 : i32
    %c8_i32 = arith.constant 8 : i32
    %9 = arith.addi %c0_i32, %c8_i32 : i32
    %c1_i32 = arith.constant 1 : i32
    %10:6 = scf.for %arg16 = %c0_i32 to %9 step %c1_i32 iter_args(%arg17 = %8, %arg18 = %8, %arg19 = %8, %arg20 = %8, %arg21 = %8, %arg22 = %8) -> (vector<8x128xf32>, vector<8x128xf32>, vector<8x128xf32>, vector<8x128xf32>, vector<8x128xf32>, vector<8x128xf32>)  : i32 {
      %c8_i32_59 = arith.constant 8 : i32
      %110 = arith.muli %arg16, %c8_i32_59 : i32
      %111 = tpu.assume_multiple %110, 8 : i32
      %112 = arith.index_cast %111 : i32 to index
      %c0_60 = arith.constant 0 : index
      %113 = vector.load %arg15[%112, %c0_60] : memref<64x1536xf32, #tpu.memory_space<vmem>>, vector<8x1536xf32>
      %114 = vector.extract_strided_slice %113 {offsets = [0, 0], sizes = [8, 512], strides = [1, 1]} : vector<8x1536xf32> to vector<8x512xf32>
      %c0_61 = arith.constant 0 : index
      %c0_62 = arith.constant 0 : index
      %115 = vector.load %arg2[%c0_61, %c0_62] : memref<128x512xf32, #tpu.memory_space<vmem>>, vector<128x512xf32>
      %cst_63 = arith.constant dense<0.000000e+00> : vector<8x512xf32>
      %116 = tpu.matmul %arg17, %115, %cst_63 {dimension_numbers = #tpu.dot_dimension_numbers<[1], [0], [0], [1], [0, 0, 1, 1], [], []>} : vector<8x128xf32>, vector<128x512xf32>, vector<8x512xf32> -> vector<8x512xf32>
      %117 = arith.addf %114, %116 : vector<8x512xf32>
      %118 = vector.extract_strided_slice %117 {offsets = [0, 0], sizes = [8, 384], strides = [1, 1]} : vector<8x512xf32> to vector<8x384xf32>
      %cst_64 = arith.constant 5.000000e-01 : f32
      %119 = vector.broadcast %cst_64 : f32 to vector<8x384xf32>
      %120 = arith.mulf %119, %118 : vector<8x384xf32>
      %121 = math.tanh %120 : vector<8x384xf32>
      %cst_65 = arith.constant 5.000000e-01 : f32
      %122 = vector.broadcast %cst_65 : f32 to vector<8x384xf32>
      %123 = arith.mulf %122, %121 : vector<8x384xf32>
      %cst_66 = arith.constant 5.000000e-01 : f32
      %124 = vector.broadcast %cst_66 : f32 to vector<8x384xf32>
      %125 = arith.addf %123, %124 : vector<8x384xf32>
      %126 = vector.extract_strided_slice %117 {offsets = [0, 384], sizes = [8, 128], strides = [1, 1]} : vector<8x512xf32> to vector<8x128xf32>
      %127 = math.tanh %126 : vector<8x128xf32>
      %128 = vector.extract_strided_slice %125 {offsets = [0, 0], sizes = [8, 128], strides = [1, 1]} : vector<8x384xf32> to vector<8x128xf32>
      %129 = vector.extract_strided_slice %125 {offsets = [0, 128], sizes = [8, 128], strides = [1, 1]} : vector<8x384xf32> to vector<8x128xf32>
      %130 = vector.extract_strided_slice %125 {offsets = [0, 256], sizes = [8, 128], strides = [1, 1]} : vector<8x384xf32> to vector<8x128xf32>
      %131 = arith.mulf %129, %arg18 : vector<8x128xf32>
      %132 = arith.mulf %128, %127 : vector<8x128xf32>
      %133 = arith.addf %131, %132 : vector<8x128xf32>
      %134 = math.tanh %133 : vector<8x128xf32>
      %135 = arith.mulf %130, %134 : vector<8x128xf32>
      %136 = vector.extract_strided_slice %113 {offsets = [0, 512], sizes = [8, 512], strides = [1, 1]} : vector<8x1536xf32> to vector<8x512xf32>
      %c0_67 = arith.constant 0 : index
      %c0_68 = arith.constant 0 : index
      %137 = vector.load %arg3[%c0_67, %c0_68] : memref<128x512xf32, #tpu.memory_space<vmem>>, vector<128x512xf32>
      %cst_69 = arith.constant dense<0.000000e+00> : vector<8x512xf32>
      %138 = tpu.matmul %arg19, %137, %cst_69 {dimension_numbers = #tpu.dot_dimension_numbers<[1], [0], [0], [1], [0, 0, 1, 1], [], []>} : vector<8x128xf32>, vector<128x512xf32>, vector<8x512xf32> -> vector<8x512xf32>
      %139 = arith.addf %136, %138 : vector<8x512xf32>
      %140 = vector.extract_strided_slice %139 {offsets = [0, 0], sizes = [8, 384], strides = [1, 1]} : vector<8x512xf32> to vector<8x384xf32>
      %cst_70 = arith.constant 5.000000e-01 : f32
      %141 = vector.broadcast %cst_70 : f32 to vector<8x384xf32>
      %142 = arith.mulf %141, %140 : vector<8x384xf32>
      %143 = math.tanh %142 : vector<8x384xf32>
      %cst_71 = arith.constant 5.000000e-01 : f32
      %144 = vector.broadcast %cst_71 : f32 to vector<8x384xf32>
      %145 = arith.mulf %144, %143 : vector<8x384xf32>
      %cst_72 = arith.constant 5.000000e-01 : f32
      %146 = vector.broadcast %cst_72 : f32 to vector<8x384xf32>
      %147 = arith.addf %145, %146 : vector<8x384xf32>
      %148 = vector.extract_strided_slice %139 {offsets = [0, 384], sizes = [8, 128], strides = [1, 1]} : vector<8x512xf32> to vector<8x128xf32>
      %149 = math.tanh %148 : vector<8x128xf32>
      %150 = vector.extract_strided_slice %147 {offsets = [0, 0], sizes = [8, 128], strides = [1, 1]} : vector<8x384xf32> to vector<8x128xf32>
      %151 = vector.extract_strided_slice %147 {offsets = [0, 128], sizes = [8, 128], strides = [1, 1]} : vector<8x384xf32> to vector<8x128xf32>
      %152 = vector.extract_strided_slice %147 {offsets = [0, 256], sizes = [8, 128], strides = [1, 1]} : vector<8x384xf32> to vector<8x128xf32>
      %153 = arith.mulf %151, %arg20 : vector<8x128xf32>
      %154 = arith.mulf %150, %149 : vector<8x128xf32>
      %155 = arith.addf %153, %154 : vector<8x128xf32>
      %156 = math.tanh %155 : vector<8x128xf32>
      %157 = arith.mulf %152, %156 : vector<8x128xf32>
      %158 = vector.extract_strided_slice %113 {offsets = [0, 1024], sizes = [8, 512], strides = [1, 1]} : vector<8x1536xf32> to vector<8x512xf32>
      %c0_73 = arith.constant 0 : index
      %c0_74 = arith.constant 0 : index
      %159 = vector.load %arg4[%c0_73, %c0_74] : memref<128x512xf32, #tpu.memory_space<vmem>>, vector<128x512xf32>
      %cst_75 = arith.constant dense<0.000000e+00> : vector<8x512xf32>
      %160 = tpu.matmul %arg21, %159, %cst_75 {dimension_numbers = #tpu.dot_dimension_numbers<[1], [0], [0], [1], [0, 0, 1, 1], [], []>} : vector<8x128xf32>, vector<128x512xf32>, vector<8x512xf32> -> vector<8x512xf32>
      %161 = arith.addf %158, %160 : vector<8x512xf32>
      %162 = vector.extract_strided_slice %161 {offsets = [0, 0], sizes = [8, 384], strides = [1, 1]} : vector<8x512xf32> to vector<8x384xf32>
      %cst_76 = arith.constant 5.000000e-01 : f32
      %163 = vector.broadcast %cst_76 : f32 to vector<8x384xf32>
      %164 = arith.mulf %163, %162 : vector<8x384xf32>
      %165 = math.tanh %164 : vector<8x384xf32>
      %cst_77 = arith.constant 5.000000e-01 : f32
      %166 = vector.broadcast %cst_77 : f32 to vector<8x384xf32>
      %167 = arith.mulf %166, %165 : vector<8x384xf32>
      %cst_78 = arith.constant 5.000000e-01 : f32
      %168 = vector.broadcast %cst_78 : f32 to vector<8x384xf32>
      %169 = arith.addf %167, %168 : vector<8x384xf32>
      %170 = vector.extract_strided_slice %161 {offsets = [0, 384], sizes = [8, 128], strides = [1, 1]} : vector<8x512xf32> to vector<8x128xf32>
      %171 = math.tanh %170 : vector<8x128xf32>
      %172 = vector.extract_strided_slice %169 {offsets = [0, 0], sizes = [8, 128], strides = [1, 1]} : vector<8x384xf32> to vector<8x128xf32>
      %173 = vector.extract_strided_slice %169 {offsets = [0, 128], sizes = [8, 128], strides = [1, 1]} : vector<8x384xf32> to vector<8x128xf32>
      %174 = vector.extract_strided_slice %169 {offsets = [0, 256], sizes = [8, 128], strides = [1, 1]} : vector<8x384xf32> to vector<8x128xf32>
      %175 = arith.mulf %173, %arg22 : vector<8x128xf32>
      %176 = arith.mulf %172, %171 : vector<8x128xf32>
      %177 = arith.addf %175, %176 : vector<8x128xf32>
      %178 = math.tanh %177 : vector<8x128xf32>
      %179 = arith.mulf %174, %178 : vector<8x128xf32>
      scf.yield %135, %133, %157, %155, %179, %177 : vector<8x128xf32>, vector<8x128xf32>, vector<8x128xf32>, vector<8x128xf32>, vector<8x128xf32>, vector<8x128xf32>
    }
    %c8_i32_8 = arith.constant 8 : i32
    %c0_9 = arith.constant 0 : index
    %c0_10 = arith.constant 0 : index
    %c0_11 = arith.constant 0 : index
    %11 = vector.load %arg6[%c0_9, %c0_10, %c0_11] : memref<3x1x128xf32, #tpu.memory_space<vmem>>, vector<1x1x128xf32>
    %12 = vector.shape_cast %11 : vector<1x1x128xf32> to vector<1x128xf32>
    %c0_12 = arith.constant 0 : index
    %c0_13 = arith.constant 0 : index
    %c0_14 = arith.constant 0 : index
    %13 = vector.load %arg7[%c0_12, %c0_13, %c0_14] : memref<3x1x128xf32, #tpu.memory_space<vmem>>, vector<1x1x128xf32>
    %14 = vector.shape_cast %13 : vector<1x1x128xf32> to vector<1x128xf32>
    %cst_15 = arith.constant dense<0.000000e+00> : vector<8xf32>
    %15 = vector.multi_reduction <add>, %10#0, %cst_15 [1] : vector<8x128xf32> to vector<8xf32>
    %16 = vector.shape_cast %15 : vector<8xf32> to vector<8x1xf32>
    %cst_16 = arith.constant 1.280000e+02 : f32
    %17 = vector.broadcast %cst_16 : f32 to vector<8x1xf32>
    %18 = arith.divf %16, %17 : vector<8x1xf32>
    %19 = vector.broadcast %18 : vector<8x1xf32> to vector<8x128xf32>
    %20 = arith.subf %10#0, %19 : vector<8x128xf32>
    %21 = arith.mulf %20, %20 : vector<8x128xf32>
    %cst_17 = arith.constant dense<0.000000e+00> : vector<8xf32>
    %22 = vector.multi_reduction <add>, %21, %cst_17 [1] : vector<8x128xf32> to vector<8xf32>
    %23 = vector.shape_cast %22 : vector<8xf32> to vector<8x1xf32>
    %cst_18 = arith.constant 1.280000e+02 : f32
    %24 = vector.broadcast %cst_18 : f32 to vector<8x1xf32>
    %25 = arith.divf %23, %24 : vector<8x1xf32>
    %26 = vector.broadcast %18 : vector<8x1xf32> to vector<8x128xf32>
    %27 = arith.subf %10#0, %26 : vector<8x128xf32>
    %cst_19 = arith.constant 9.99999974E-6 : f32
    %28 = vector.broadcast %cst_19 : f32 to vector<8x1xf32>
    %29 = arith.addf %25, %28 : vector<8x1xf32>
    %30 = math.rsqrt %29 : vector<8x1xf32>
    %31 = vector.broadcast %30 : vector<8x1xf32> to vector<8x128xf32>
    %32 = arith.mulf %27, %31 : vector<8x128xf32>
    %33 = vector.broadcast %12 : vector<1x128xf32> to vector<8x128xf32>
    %34 = arith.mulf %32, %33 : vector<8x128xf32>
    %35 = vector.broadcast %14 : vector<1x128xf32> to vector<8x128xf32>
    %36 = arith.addf %34, %35 : vector<8x128xf32>
    %c1 = arith.constant 1 : index
    %c0_20 = arith.constant 0 : index
    %c0_21 = arith.constant 0 : index
    %37 = vector.load %arg6[%c1, %c0_20, %c0_21] : memref<3x1x128xf32, #tpu.memory_space<vmem>>, vector<1x1x128xf32>
    %38 = vector.shape_cast %37 : vector<1x1x128xf32> to vector<1x128xf32>
    %c1_22 = arith.constant 1 : index
    %c0_23 = arith.constant 0 : index
    %c0_24 = arith.constant 0 : index
    %39 = vector.load %arg7[%c1_22, %c0_23, %c0_24] : memref<3x1x128xf32, #tpu.memory_space<vmem>>, vector<1x1x128xf32>
    %40 = vector.shape_cast %39 : vector<1x1x128xf32> to vector<1x128xf32>
    %cst_25 = arith.constant dense<0.000000e+00> : vector<8xf32>
    %41 = vector.multi_reduction <add>, %10#2, %cst_25 [1] : vector<8x128xf32> to vector<8xf32>
    %42 = vector.shape_cast %41 : vector<8xf32> to vector<8x1xf32>
    %cst_26 = arith.constant 1.280000e+02 : f32
    %43 = vector.broadcast %cst_26 : f32 to vector<8x1xf32>
    %44 = arith.divf %42, %43 : vector<8x1xf32>
    %45 = vector.broadcast %44 : vector<8x1xf32> to vector<8x128xf32>
    %46 = arith.subf %10#2, %45 : vector<8x128xf32>
    %47 = arith.mulf %46, %46 : vector<8x128xf32>
    %cst_27 = arith.constant dense<0.000000e+00> : vector<8xf32>
    %48 = vector.multi_reduction <add>, %47, %cst_27 [1] : vector<8x128xf32> to vector<8xf32>
    %49 = vector.shape_cast %48 : vector<8xf32> to vector<8x1xf32>
    %cst_28 = arith.constant 1.280000e+02 : f32
    %50 = vector.broadcast %cst_28 : f32 to vector<8x1xf32>
    %51 = arith.divf %49, %50 : vector<8x1xf32>
    %52 = vector.broadcast %44 : vector<8x1xf32> to vector<8x128xf32>
    %53 = arith.subf %10#2, %52 : vector<8x128xf32>
    %cst_29 = arith.constant 9.99999974E-6 : f32
    %54 = vector.broadcast %cst_29 : f32 to vector<8x1xf32>
    %55 = arith.addf %51, %54 : vector<8x1xf32>
    %56 = math.rsqrt %55 : vector<8x1xf32>
    %57 = vector.broadcast %56 : vector<8x1xf32> to vector<8x128xf32>
    %58 = arith.mulf %53, %57 : vector<8x128xf32>
    %59 = vector.broadcast %38 : vector<1x128xf32> to vector<8x128xf32>
    %60 = arith.mulf %58, %59 : vector<8x128xf32>
    %61 = vector.broadcast %40 : vector<1x128xf32> to vector<8x128xf32>
    %62 = arith.addf %60, %61 : vector<8x128xf32>
    %c2 = arith.constant 2 : index
    %c0_30 = arith.constant 0 : index
    %c0_31 = arith.constant 0 : index
    %63 = vector.load %arg6[%c2, %c0_30, %c0_31] : memref<3x1x128xf32, #tpu.memory_space<vmem>>, vector<1x1x128xf32>
    %64 = vector.shape_cast %63 : vector<1x1x128xf32> to vector<1x128xf32>
    %c2_32 = arith.constant 2 : index
    %c0_33 = arith.constant 0 : index
    %c0_34 = arith.constant 0 : index
    %65 = vector.load %arg7[%c2_32, %c0_33, %c0_34] : memref<3x1x128xf32, #tpu.memory_space<vmem>>, vector<1x1x128xf32>
    %66 = vector.shape_cast %65 : vector<1x1x128xf32> to vector<1x128xf32>
    %cst_35 = arith.constant dense<0.000000e+00> : vector<8xf32>
    %67 = vector.multi_reduction <add>, %10#4, %cst_35 [1] : vector<8x128xf32> to vector<8xf32>
    %68 = vector.shape_cast %67 : vector<8xf32> to vector<8x1xf32>
    %cst_36 = arith.constant 1.280000e+02 : f32
    %69 = vector.broadcast %cst_36 : f32 to vector<8x1xf32>
    %70 = arith.divf %68, %69 : vector<8x1xf32>
    %71 = vector.broadcast %70 : vector<8x1xf32> to vector<8x128xf32>
    %72 = arith.subf %10#4, %71 : vector<8x128xf32>
    %73 = arith.mulf %72, %72 : vector<8x128xf32>
    %cst_37 = arith.constant dense<0.000000e+00> : vector<8xf32>
    %74 = vector.multi_reduction <add>, %73, %cst_37 [1] : vector<8x128xf32> to vector<8xf32>
    %75 = vector.shape_cast %74 : vector<8xf32> to vector<8x1xf32>
    %cst_38 = arith.constant 1.280000e+02 : f32
    %76 = vector.broadcast %cst_38 : f32 to vector<8x1xf32>
    %77 = arith.divf %75, %76 : vector<8x1xf32>
    %78 = vector.broadcast %70 : vector<8x1xf32> to vector<8x128xf32>
    %79 = arith.subf %10#4, %78 : vector<8x128xf32>
    %cst_39 = arith.constant 9.99999974E-6 : f32
    %80 = vector.broadcast %cst_39 : f32 to vector<8x1xf32>
    %81 = arith.addf %77, %80 : vector<8x1xf32>
    %82 = math.rsqrt %81 : vector<8x1xf32>
    %83 = vector.broadcast %82 : vector<8x1xf32> to vector<8x128xf32>
    %84 = arith.mulf %79, %83 : vector<8x128xf32>
    %85 = vector.broadcast %64 : vector<1x128xf32> to vector<8x128xf32>
    %86 = arith.mulf %84, %85 : vector<8x128xf32>
    %87 = vector.broadcast %66 : vector<1x128xf32> to vector<8x128xf32>
    %88 = arith.addf %86, %87 : vector<8x128xf32>
    %89 = tpu.concatenate %36, %62, %88 in 1 : vector<8x128xf32>, vector<8x128xf32>, vector<8x128xf32> -> vector<8x384xf32>
    %c0_40 = arith.constant 0 : index
    %c0_41 = arith.constant 0 : index
    %90 = vector.load %arg8[%c0_40, %c0_41] : memref<384x128xf32, #tpu.memory_space<vmem>>, vector<384x128xf32>
    %cst_42 = arith.constant dense<0.000000e+00> : vector<8x128xf32>
    %91 = tpu.matmul %89, %90, %cst_42 {dimension_numbers = #tpu.dot_dimension_numbers<[1], [0], [0], [1], [0, 0, 1, 1], [], []>} : vector<8x384xf32>, vector<384x128xf32>, vector<8x128xf32> -> vector<8x128xf32>
    %c0_43 = arith.constant 0 : index
    %c0_44 = arith.constant 0 : index
    %92 = vector.load %arg9[%c0_43, %c0_44] : memref<1x128xf32, #tpu.memory_space<vmem>>, vector<1x128xf32>
    %93 = vector.broadcast %92 : vector<1x128xf32> to vector<8x128xf32>
    %94 = arith.addf %91, %93 : vector<8x128xf32>
    %cst_45 = arith.constant 0.000000e+00 : f32
    %95 = vector.broadcast %cst_45 : f32 to vector<8x128xf32>
    %96 = arith.maximumf %94, %95 : vector<8x128xf32>
    %c0_46 = arith.constant 0 : index
    %c0_47 = arith.constant 0 : index
    %97 = vector.load %arg10[%c0_46, %c0_47] : memref<128x128xf32, #tpu.memory_space<vmem>>, vector<128x128xf32>
    %cst_48 = arith.constant dense<0.000000e+00> : vector<8x128xf32>
    %98 = tpu.matmul %96, %97, %cst_48 {dimension_numbers = #tpu.dot_dimension_numbers<[1], [0], [0], [1], [0, 0, 1, 1], [], []>} : vector<8x128xf32>, vector<128x128xf32>, vector<8x128xf32> -> vector<8x128xf32>
    %c0_49 = arith.constant 0 : index
    %c0_50 = arith.constant 0 : index
    %99 = vector.load %arg11[%c0_49, %c0_50] : memref<1x128xf32, #tpu.memory_space<vmem>>, vector<1x128xf32>
    %100 = vector.broadcast %99 : vector<1x128xf32> to vector<8x128xf32>
    %101 = arith.addf %98, %100 : vector<8x128xf32>
    %cst_51 = arith.constant 0.000000e+00 : f32
    %102 = vector.broadcast %cst_51 : f32 to vector<8x128xf32>
    %103 = arith.maximumf %101, %102 : vector<8x128xf32>
    %c0_52 = arith.constant 0 : index
    %c0_53 = arith.constant 0 : index
    %104 = vector.load %arg12[%c0_52, %c0_53] : memref<128x128xf32, #tpu.memory_space<vmem>>, vector<128x128xf32>
    %cst_54 = arith.constant dense<0.000000e+00> : vector<8x128xf32>
    %105 = tpu.matmul %103, %104, %cst_54 {dimension_numbers = #tpu.dot_dimension_numbers<[1], [0], [0], [1], [0, 0, 1, 1], [], []>} : vector<8x128xf32>, vector<128x128xf32>, vector<8x128xf32> -> vector<8x128xf32>
    %c0_55 = arith.constant 0 : index
    %c0_56 = arith.constant 0 : index
    %106 = vector.load %arg13[%c0_55, %c0_56] : memref<1x128xf32, #tpu.memory_space<vmem>>, vector<1x128xf32>
    %107 = vector.broadcast %106 : vector<1x128xf32> to vector<8x128xf32>
    %108 = arith.addf %105, %107 : vector<8x128xf32>
    %c0_57 = arith.constant 0 : index
    %c0_58 = arith.constant 0 : index
    %109 = vector.load %arg14[%c0_57, %c0_58] : memref<8x128xf32, #tpu.memory_space<vmem>>, vector<8x128xf32>
    tpu.vector_store %arg14[%c0_57, %c0_58], %108 {strides = array<i32>} : memref<8x128xf32, #tpu.memory_space<vmem>>, vector<8x128xf32>,
    return
  }
}

</mosaic_0001>

<llo_original>
// kernel: emoreact_forward.1
$region0: #{emoreact_forward.1}
  #allocation0 [shape = 'u32[]', space=smem, size = 0x4, offset = 0x4, fixed_abs, tag = 'smem constant byte address 0x4 - core index']
  #allocation1 [shape = 'u32[144,128]{1,0:T(1,128)}', space=vmem, size = 0x12000, scoped, tag = 'internal scratch']
  #allocation2 [shape = 'f32[64,1536]{1,0:T(8,128)}', space=vmem, size = 0x60000, scoped, tag = 'scratch operand']
  %s0 = inlined_call_operand.vmem [shape: f32[64,128], index: 0, kind: input, shape index: {}]
  %s1 = inlined_call_operand.hbm [shape: f32[128,1536], index: 1, kind: input, shape index: {}]
  %s2 = inlined_call_operand.hbm [shape: f32[128,512], index: 2, kind: input, shape index: {}]
  %s3 = inlined_call_operand.hbm [shape: f32[128,512], index: 3, kind: input, shape index: {}]
  %s4 = inlined_call_operand.hbm [shape: f32[128,512], index: 4, kind: input, shape index: {}]
  %s5 = inlined_call_operand.hbm [shape: f32[1,1536], index: 5, kind: input, shape index: {}]
  %s6 = inlined_call_operand.hbm [shape: f32[3,1,128], index: 6, kind: input, shape index: {}]
  %s7 = inlined_call_operand.hbm [shape: f32[3,1,128], index: 7, kind: input, shape index: {}]
  %s8 = inlined_call_operand.hbm [shape: f32[384,128], index: 8, kind: input, shape index: {}]
  %s9 = inlined_call_operand.vmem [shape: f32[1,128], index: 9, kind: input, shape index: {}]
  %s10 = inlined_call_operand.vmem [shape: f32[128,128], index: 10, kind: input, shape index: {}]
  %s11 = inlined_call_operand.vmem [shape: f32[1,128], index: 11, kind: input, shape index: {}]
  %s12 = inlined_call_operand.hbm [shape: f32[128,128], index: 12, kind: input, shape index: {}]
  %s13 = inlined_call_operand.hbm [shape: f32[1,128], index: 13, kind: input, shape index: {}]
  %s14 = inlined_call_operand.vmem [shape: f32[8,128], index: 14, kind: output, shape index: {}]
  %s15 = sld [smem:[#allocation0]]
  $region113: #{emoreact_forward.1} parent=0
    _
  %s17 = ssub.s32 1, %s15
  %s18 = scalar_select 0, %s17, %s15
  $region1: #{emoreact_forward.1} parent=0
    #allocation3 [shape = 'u8[786432]{0}', space=vmem, size = 0xc0000, scoped, tag = 'input window, operand 1, single buffered']
    #allocation4 [shape = 's32[1]{0}', space=sflag, size = 0x4, scoped, tag = 'scoped memory for emoreact_forward.1']
    #allocation5 [shape = 'u8[262144]{0}', space=vmem, size = 0x40000, scoped, tag = 'input window, operand 2, single buffered']
    #allocation6 [shape = 's32[1]{0}', space=sflag, size = 0x4, scoped, tag = 'scoped memory for emoreact_forward.1']
    #allocation7 [shape = 'u8[262144]{0}', space=vmem, size = 0x40000, scoped, tag = 'input window, operand 3, single buffered']
    #allocation8 [shape = 'u8[262144]{0}', space=vmem, size = 0x40000, scoped, tag = 'input window, operand 4, single buffered']
    #allocation9 [shape = 's32[1]{0}', space=sflag, size = 0x4, scoped, tag = 'scoped memory for emoreact_forward.1']
    #allocation10 [shape = 'u8[6144]{0}', space=vmem, size = 0x1800, scoped, tag = 'input window, operand 5, single buffered']
    #allocation11 [shape = 'u8[1536]{0}', space=vmem, size = 0x800, scoped, tag = 'input window, operand 6, single buffered']
    #allocation12 [shape = 's32[1]{0}', space=sflag, size = 0x4, scoped, tag = 'scoped memory for emoreact_forward.1']
    #allocation13 [shape = 'u8[1536]{0}', space=vmem, size = 0x800, scoped, tag = 'input window, operand 7, single buffered']
    #allocation14 [shape = 'u8[196608]{0}', space=vmem, size = 0x30000, scoped, tag = 'input window, operand 8, single buffered']
    #allocation15 [shape = 's32[1]{0}', space=sflag, size = 0x4, scoped, tag = 'scoped memory for emoreact_forward.1']
    #allocation16 [shape = 'u8[65536]{0}', space=vmem, size = 0x10000, scoped, tag = 'input window, operand 12, single buffered']
    #allocation17 [shape = 'u8[512]{0}', space=vmem, size = 0x400, scoped, tag = 'input window, operand 13, single buffered']
    #allocation18 [shape = 's32[1]{0}', space=sflag, size = 0x4, scoped, tag = 'scoped memory for emoreact_forward.1']
    %19 = vsyncpa [#allocation4], 0
    %20 = vsyncpa [#allocation6], 0
    %21 = vsyncpa [#allocation9], 0
    %22 = vsyncpa [#allocation12], 0
    %23 = vsyncpa [#allocation15], 0
    %24 = vsyncpa [#allocation18], 0
    // Predicated region
    $region2: #{emoreact_forward.1} parent=1 // pred_check
      _
    $region3: #{emoreact_forward.1} parent=1 // pred_check_branch
      %26 = sbr.rel (0) target = $region5
    $region4: #{emoreact_forward.1} parent=1 // pred_region
      _
    $region5: #{emoreact_forward.1} parent=1 // pred_fallthru
      _
    // Predicated region
    $region6: #{emoreact_forward.1} parent=1 // pred_check
      _
    $region7: #{emoreact_forward.1} parent=1 // pred_check_branch
      %28 = sbr.rel (0) target = $region9
    $region8: #{emoreact_forward.1} parent=1 // pred_region
      %s30 = ssub.s32 24576, 24576
      %31 = vsyncadd [#allocation4], %s30
      %s32 = sshll.u32 [#allocation3], 4
      %s33 = int_to_ptr.vmem [resolvable:$true] %s32
      %38 = dma.hbm_to_vmem [thread:$0]  %s1, 24576, %s33, [#allocation4], 1536, 1536, 96
    $region9: #{emoreact_forward.1} parent=1 // pred_fallthru
      _
    // Predicated region
    $region10: #{emoreact_forward.1} parent=1 // pred_check
      _
    $region11: #{emoreact_forward.1} parent=1 // pred_check_branch
      %40 = sbr.rel (0) target = $region13
    $region12: #{emoreact_forward.1} parent=1 // pred_region
      %s42 = ssub.s32 8192, 8192
      %43 = vsyncadd [#allocation6], %s42
      %s44 = sshll.u32 [#allocation5], 4
      %s45 = int_to_ptr.vmem [resolvable:$true] %s44
      %50 = dma.hbm_to_vmem [thread:$0]  %s2, 8192, %s45, [#allocation6], 512, 512, 32
    $region13: #{emoreact_forward.1} parent=1 // pred_fallthru
      _
    // Predicated region
    $region14: #{emoreact_forward.1} parent=1 // pred_check
      _
    $region15: #{emoreact_forward.1} parent=1 // pred_check_branch
      %52 = sbr.rel (0) target = $region17
    $region16: #{emoreact_forward.1} parent=1 // pred_region
      %s54 = ssub.s32 8192, 8192
      %55 = vsyncadd [#allocation6], %s54
      %s56 = sshll.u32 [#allocation7], 4
      %s57 = int_to_ptr.vmem [resolvable:$true] %s56
      %62 = dma.hbm_to_vmem [thread:$0]  %s3, 8192, %s57, [#allocation6], 512, 512, 32
    $region17: #{emoreact_forward.1} parent=1 // pred_fallthru
      _
    // Predicated region
    $region18: #{emoreact_forward.1} parent=1 // pred_check
      _
    $region19: #{emoreact_forward.1} parent=1 // pred_check_branch
      %64 = sbr.rel (0) target = $region21
    $region20: #{emoreact_forward.1} parent=1 // pred_region
      %s66 = ssub.s32 8192, 8192
      %67 = vsyncadd [#allocation9], %s66
      %s68 = sshll.u32 [#allocation8], 4
      %s69 = int_to_ptr.vmem [resolvable:$true] %s68
      %74 = dma.hbm_to_vmem [thread:$0]  %s4, 8192, %s69, [#allocation9], 512, 512, 32
    $region21: #{emoreact_forward.1} parent=1 // pred_fallthru
      _
    // Predicated region
    $region22: #{emoreact_forward.1} parent=1 // pred_check
      _
    $region23: #{emoreact_forward.1} parent=1 // pred_check_branch
      %76 = sbr.rel (0) target = $region25
    $region24: #{emoreact_forward.1} parent=1 // pred_region
      %s78 = ssub.s32 192, 192
      %79 = vsyncadd [#allocation9], %s78
      %s81 = sshll.u32 [#allocation10], 4
      %s82 = int_to_ptr.vmem [resolvable:$true] %s81
      %84 = dma.hbm_to_vmem [thread:$0]  %s5, 192, %s82, [#allocation9]
    $region25: #{emoreact_forward.1} parent=1 // pred_fallthru
      _
    // Predicated region
    $region26: #{emoreact_forward.1} parent=1 // pred_check
      _
    $region27: #{emoreact_forward.1} parent=1 // pred_check_branch
      %86 = sbr.rel (0) target = $region29
    $region28: #{emoreact_forward.1} parent=1 // pred_region
      %s88 = ssub.s32 48, 48
      %89 = vsyncadd [#allocation12], %s88
      %s90 = sshll.u32 [#allocation11], 4
      %s91 = int_to_ptr.vmem [resolvable:$true] %s90
      %96 = dma.hbm_to_vmem [thread:$0]  %s6, 48, %s91, [#allocation12], 16, 16, 1
    $region29: #{emoreact_forward.1} parent=1 // pred_fallthru
      _
    // Predicated region
    $region30: #{emoreact_forward.1} parent=1 // pred_check
      _
    $region31: #{emoreact_forward.1} parent=1 // pred_check_branch
      %98 = sbr.rel (0) target = $region33
    $region32: #{emoreact_forward.1} parent=1 // pred_region
      %s100 = ssub.s32 48, 48
      %101 = vsyncadd [#allocation12], %s100
      %s102 = sshll.u32 [#allocation13], 4
      %s103 = int_to_ptr.vmem [resolvable:$true] %s102
      %108 = dma.hbm_to_vmem [thread:$0]  %s7, 48, %s103, [#allocation12], 16, 16, 1
    $region33: #{emoreact_forward.1} parent=1 // pred_fallthru
      _
    // Predicated region
    $region34: #{emoreact_forward.1} parent=1 // pred_check
      _
    $region35: #{emoreact_forward.1} parent=1 // pred_check_branch
      %110 = sbr.rel (0) target = $region37
    $region36: #{emoreact_forward.1} parent=1 // pred_region
      %s112 = ssub.s32 6144, 6144
      %113 = vsyncadd [#allocation15], %s112
      %s114 = sshll.u32 [#allocation14], 4
      %s115 = int_to_ptr.vmem [resolvable:$true] %s114
      %120 = dma.hbm_to_vmem [thread:$0]  %s8, 6144, %s115, [#allocation15], 128, 128, 8
    $region37: #{emoreact_forward.1} parent=1 // pred_fallthru
      _
    // Predicated region
    $region38: #{emoreact_forward.1} parent=1 // pred_check
      _
    $region39: #{emoreact_forward.1} parent=1 // pred_check_branch
      %122 = sbr.rel (0) target = $region41
    $region40: #{emoreact_forward.1} parent=1 // pred_region
      _
    $region41: #{emoreact_forward.1} parent=1 // pred_fallthru
      _
    // Predicated region
    $region42: #{emoreact_forward.1} parent=1 // pred_check
      _
    $region43: #{emoreact_forward.1} parent=1 // pred_check_branch
      %124 = sbr.rel (0) target = $region45
    $region44: #{emoreact_forward.1} parent=1 // pred_region
      _
    $region45: #{emoreact_forward.1} parent=1 // pred_fallthru
      _
    // Predicated region
    $region46: #{emoreact_forward.1} parent=1 // pred_check
      _
    $region47: #{emoreact_forward.1} parent=1 // pred_check_branch
      %126 = sbr.rel (0) target = $region49
    $region48: #{emoreact_forward.1} parent=1 // pred_region
      _
    $region49: #{emoreact_forward.1} parent=1 // pred_fallthru
      _
    // Predicated region
    $region50: #{emoreact_forward.1} parent=1 // pred_check
      _
    $region51: #{emoreact_forward.1} parent=1 // pred_check_branch
      %128 = sbr.rel (0) target = $region53
    $region52: #{emoreact_forward.1} parent=1 // pred_region
      %s130 = ssub.s32 2048, 2048
      %131 = vsyncadd [#allocation15], %s130
      %s132 = sshll.u32 [#allocation16], 4
      %s133 = int_to_ptr.vmem [resolvable:$true] %s132
      %138 = dma.hbm_to_vmem [thread:$0]  %s12, 2048, %s133, [#allocation15], 128, 128, 8
    $region53: #{emoreact_forward.1} parent=1 // pred_fallthru
      _
    // Predicated region
    $region54: #{emoreact_forward.1} parent=1 // pred_check
      _
    $region55: #{emoreact_forward.1} parent=1 // pred_check_branch
      %140 = sbr.rel (0) target = $region57
    $region56: #{emoreact_forward.1} parent=1 // pred_region
      %s142 = ssub.s32 16, 16
      %143 = vsyncadd [#allocation18], %s142
      %s145 = sshll.u32 [#allocation17], 4
      %s146 = int_to_ptr.vmem [resolvable:$true] %s145
      %148 = dma.hbm_to_vmem [thread:$0]  %s13, 16, %s146, [#allocation18]
    $region57: #{emoreact_forward.1} parent=1 // pred_fallthru
      _
    // Predicated region
    $region58: #{emoreact_forward.1} parent=1 // pred_check
      _
    $region59: #{emoreact_forward.1} parent=1 // pred_check_branch
      %150 = sbr.rel (0) target = $region61
    $region60: #{emoreact_forward.1} parent=1 // pred_region
      %151 = dma.done [#allocation4], 24576
    $region61: #{emoreact_forward.1} parent=1 // pred_fallthru
      _
    // Predicated region
    $region62: #{emoreact_forward.1} parent=1 // pred_check
      _
    $region63: #{emoreact_forward.1} parent=1 // pred_check_branch
      %153 = sbr.rel (0) target = $region65
    $region64: #{emoreact_forward.1} parent=1 // pred_region
      %154 = dma.done [#allocation6], 8192
    $region65: #{emoreact_forward.1} parent=1 // pred_fallthru
      _
    // Predicated region
    $region66: #{emoreact_forward.1} parent=1 // pred_check
      _
    $region67: #{emoreact_forward.1} parent=1 // pred_check_branch
      %156 = sbr.rel (0) target = $region69
    $region68: #{emoreact_forward.1} parent=1 // pred_region
      %157 = dma.done [#allocation6], 8192
    $region69: #{emoreact_forward.1} parent=1 // pred_fallthru
      _
    // Predicated region
    $region70: #{emoreact_forward.1} parent=1 // pred_check
      _
    $region71: #{emoreact_forward.1} parent=1 // pred_check_branch
      %159 = sbr.rel (0) target = $region73
    $region72: #{emoreact_forward.1} parent=1 // pred_region
      %160 = dma.done [#allocation9], 8192
    $region73: #{emoreact_forward.1} parent=1 // pred_fallthru
      _
    // Predicated region
    $region74: #{emoreact_forward.1} parent=1 // pred_check
      _
    $region75: #{emoreact_forward.1} parent=1 // pred_check_branch
      %162 = sbr.rel (0) target = $region77
    $region76: #{emoreact_forward.1} parent=1 // pred_region
      %163 = dma.done [#allocation9], 192
    $region77: #{emoreact_forward.1} parent=1 // pred_fallthru
      _
    // Predicated region
    $region78: #{emoreact_forward.1} parent=1 // pred_check
      _
    $region79: #{emoreact_forward.1} parent=1 // pred_check_branch
      %165 = sbr.rel (0) target = $region81
    $region80: #{emoreact_forward.1} parent=1 // pred_region
      %166 = dma.done [#allocation12], 48
    $region81: #{emoreact_forward.1} parent=1 // pred_fallthru
      _
    // Predicated region
    $region82: #{emoreact_forward.1} parent=1 // pred_check
      _
    $region83: #{emoreact_forward.1} parent=1 // pred_check_branch
      %168 = sbr.rel (0) target = $region85
    $region84: #{emoreact_forward.1} parent=1 // pred_region
      %169 = dma.done [#allocation12], 48
    $region85: #{emoreact_forward.1} parent=1 // pred_fallthru
      _
    // Predicated region
    $region86: #{emoreact_forward.1} parent=1 // pred_check
      _
    $region87: #{emoreact_forward.1} parent=1 // pred_check_branch
      %171 = sbr.rel (0) target = $region89
    $region88: #{emoreact_forward.1} parent=1 // pred_region
      %172 = dma.done [#allocation15], 6144
    $region89: #{emoreact_forward.1} parent=1 // pred_fallthru
      _
    // Predicated region
    $region90: #{emoreact_forward.1} parent=1 // pred_check
      _
    $region91: #{emoreact_forward.1} parent=1 // pred_check_branch
      %174 = sbr.rel (0) target = $region93
    $region92: #{emoreact_forward.1} parent=1 // pred_region
      %175 = dma.done [#allocation15], 2048
    $region93: #{emoreact_forward.1} parent=1 // pred_fallthru
      _
    // Predicated region
    $region94: #{emoreact_forward.1} parent=1 // pred_check
      _
    $region95: #{emoreact_forward.1} parent=1 // pred_check_branch
      %177 = sbr.rel (0) target = $region97
    $region96: #{emoreact_forward.1} parent=1 // pred_region
      %178 = dma.done [#allocation18], 16
    $region97: #{emoreact_forward.1} parent=1 // pred_fallthru
      _
    %v179 = vld [vmem:[%s0] sm:$0xff]
    %v180 = vld [vmem:[%s0 + $0x8] sm:$0xff]
    %v181 = vld [vmem:[%s0 + $0x10] sm:$0xff]
    %v182 = vld [vmem:[%s0 + $0x18] sm:$0xff]
    %v183 = vld [vmem:[%s0 + $0x20] sm:$0xff]
    %v184 = vld [vmem:[%s0 + $0x28] sm:$0xff]
    %v185 = vld [vmem:[%s0 + $0x30] sm:$0xff]
    %v186 = vld [vmem:[%s0 + $0x38] sm:$0xff]
    %v187 = vtanh.pop %v179
    %v188 = vtanh.pop %v180
    %v189 = vtanh.pop %v181
    %v190 = vtanh.pop %v182
    %v191 = vtanh.pop %v183
    %v192 = vtanh.pop %v184
    %v193 = vtanh.pop %v185
    %v194 = vtanh.pop %v186
    %v195 = vld [vmem:[#allocation3] sm:$0xff]
    %v196 = vld [vmem:[#allocation3 + $0x8] sm:$0xff]
    %v197 = vld [vmem:[#allocation3 + $0x10] sm:$0xff]
    %v198 = vld [vmem:[#allocation3 + $0x18] sm:$0xff]
    %v199 = vld [vmem:[#allocation3 + $0x20] sm:$0xff]
    %v200 = vld [vmem:[#allocation3 + $0x28] sm:$0xff]
    %v201 = vld [vmem:[#allocation3 + $0x30] sm:$0xff]
    %v202 = vld [vmem:[#allocation3 + $0x38] sm:$0xff]
    %v203 = vld [vmem:[#allocation3 + $0x40] sm:$0xff]
    %v204 = vld [vmem:[#allocation3 + $0x48] sm:$0xff]
    %v205 = vld [vmem:[#allocation3 + $0x50] sm:$0xff]
    %v206 = vld [vmem:[#allocation3 + $0x58] sm:$0xff]
    %v207 = vld [vmem:[#allocation3 + $0x60] sm:$0xff]
    %v208 = vld [vmem:[#allocation3 + $0x68] sm:$0xff]
    %v209 = vld [vmem:[#allocation3 + $0x70] sm:$0xff]
    %v210 = vld [vmem:[#allocation3 + $0x78] sm:$0xff]
    %v211 = vld [vmem:[#allocation3 + $0x80] sm:$0xff]
    %v212 = vld [vmem:[#allocation3 + $0x88] sm:$0xff]
    %v213 = vld [vmem:[#allocation3 + $0x90] sm:$0xff]
    %v214 = vld [vmem:[#allocation3 + $0x98] sm:$0xff]
    %v215 = vld [vmem:[#allocation3 + $0xa0] sm:$0xff]
    %v216 = vld [vmem:[#allocation3 + $0xa8] sm:$0xff]
    %v217 = vld [vmem:[#allocation3 + $0xb0] sm:$0xff]
    %v218 = vld [vmem:[#allocation3 + $0xb8] sm:$0xff]
    %v219 = vld [vmem:[#allocation3 + $0xc0] sm:$0xff]
    %v220 = vld [vmem:[#allocation3 + $0xc8] sm:$0xff]
    %v221 = vld [vmem:[#allocation3 + $0xd0] sm:$0xff]
    %v222 = vld [vmem:[#allocation3 + $0xd8] sm:$0xff]
    %v223 = vld [vmem:[#allocation3 + $0xe0] sm:$0xff]
    %v224 = vld [vmem:[#allocation3 + $0xe8] sm:$0xff]
    %v225 = vld [vmem:[#allocation3 + $0xf0] sm:$0xff]
    %v226 = vld [vmem:[#allocation3 + $0xf8] sm:$0xff]
    %v227 = vld [vmem:[#allocation3 + $0x100] sm:$0xff]
    %v228 = vld [vmem:[#allocation3 + $0x108] sm:$0xff]
    %v229 = vld [vmem:[#allocation3 + $0x110] sm:$0xff]
    %v230 = vld [vmem:[#allocation3 + $0x118] sm:$0xff]
    %v231 = vld [vmem:[#allocation3 + $0x120] sm:$0xff]
    %v232 = vld [vmem:[#allocation3 + $0x128] sm:$0xff]
    %v233 = vld [vmem:[#allocation3 + $0x130] sm:$0xff]
    %v234 = vld [vmem:[#allocation3 + $0x138] sm:$0xff]
    %v235 = vld [vmem:[#allocation3 + $0x140] sm:$0xff]
    %v236 = vld [vmem:[#allocation3 + $0x148] sm:$0xff]
    %v237 = vld [vmem:[#allocation3 + $0x150] sm:$0xff]
    %v238 = vld [vmem:[#allocation3 + $0x158] sm:$0xff]
    %v239 = vld [vmem:[#allocation3 + $0x160] sm:$0xff]
    %v240 = vld [vmem:[#allocation3 + $0x168] sm:$0xff]
    %v241 = vld [vmem:[#allocation3 + $0x170] sm:$0xff]
    %v242 = vld [vmem:[#allocation3 + $0x178] sm:$0xff]
    %v243 = vld [vmem:[#allocation3 + $0x180] sm:$0xff]
    %v244 = vld [vmem:[#allocation3 + $0x188] sm:$0xff]
    %v245 = vld [vmem:[#allocation3 + $0x190] sm:$0xff]
    %v246 = vld [vmem:[#allocation3 + $0x198] sm:$0xff]
    %v247 = vld [vmem:[#allocation3 + $0x1a0] sm:$0xff]
    %v248 = vld [vmem:[#allocation3 + $0x1a8] sm:$0xff]
    %v249 = vld [vmem:[#allocation3 + $0x1b0] sm:$0xff]
    %v250 = vld [vmem:[#allocation3 + $0x1b8] sm:$0xff]
    %v251 = vld [vmem:[#allocation3 + $0x1c0] sm:$0xff]
    %v252 = vld [vmem:[#allocation3 + $0x1c8] sm:$0xff]
    %v253 = vld [vmem:[#allocation3 + $0x1d0] sm:$0xff]
    %v254 = vld [vmem:[#allocation3 + $0x1d8] sm:$0xff]
    %v255 = vld [vmem:[#allocation3 + $0x1e0] sm:$0xff]
    %v256 = vld [vmem:[#allocation3 + $0x1e8] sm:$0xff]
    %v257 = vld [vmem:[#allocation3 + $0x1f0] sm:$0xff]
    %v258 = vld [vmem:[#allocation3 + $0x1f8] sm:$0xff]
    %v259 = vld [vmem:[#allocation3 + $0x200] sm:$0xff]
    %v260 = vld [vmem:[#allocation3 + $0x208] sm:$0xff]
    %v261 = vld [vmem:[#allocation3 + $0x210] sm:$0xff]
    %v262 = vld [vmem:[#allocation3 + $0x218] sm:$0xff]
    %v263 = vld [vmem:[#allocation3 + $0x220] sm:$0xff]
    %v264 = vld [vmem:[#allocation3 + $0x228] sm:$0xff]
    %v265 = vld [vmem:[#allocation3 + $0x230] sm:$0xff]
    %v266 = vld [vmem:[#allocation3 + $0x238] sm:$0xff]
    %v267 = vld [vmem:[#allocation3 + $0x240] sm:$0xff]
    %v268 = vld [vmem:[#allocation3 + $0x248] sm:$0xff]
    %v269 = vld [vmem:[#allocation3 + $0x250] sm:$0xff]
    %v270 = vld [vmem:[#allocation3 + $0x258] sm:$0xff]
    %v271 = vld [vmem:[#allocation3 + $0x260] sm:$0xff]
    %v272 = vld [vmem:[#allocation3 + $0x268] sm:$0xff]
    %v273 = vld [vmem:[#allocation3 + $0x270] sm:$0xff]
    %v274 = vld [vmem:[#allocation3 + $0x278] sm:$0xff]
    %v275 = vld [vmem:[#allocation3 + $0x280] sm:$0xff]
    %v276 = vld [vmem:[#allocation3 + $0x288] sm:$0xff]
    %v277 = vld [vmem:[#allocation3 + $0x290] sm:$0xff]
    %v278 = vld [vmem:[#allocation3 + $0x298] sm:$0xff]
    %v279 = vld [vmem:[#allocation3 + $0x2a0] sm:$0xff]
    %v280 = vld [vmem:[#allocation3 + $0x2a8] sm:$0xff]
    %v281 = vld [vmem:[#allocation3 + $0x2b0] sm:$0xff]
    %v282 = vld [vmem:[#allocation3 + $0x2b8] sm:$0xff]
    %v283 = vld [vmem:[#allocation3 + $0x2c0] sm:$0xff]
    %v284 = vld [vmem:[#allocation3 + $0x2c8] sm:$0xff]
    %v285 = vld [vmem:[#allocation3 + $0x2d0] sm:$0xff]
    %v286 = vld [vmem:[#allocation3 + $0x2d8] sm:$0xff]
    %v287 = vld [vmem:[#allocation3 + $0x2e0] sm:$0xff]
    %v288 = vld [vmem:[#allocation3 + $0x2e8] sm:$0xff]
    %v289 = vld [vmem:[#allocation3 + $0x2f0] sm:$0xff]
    %v290 = vld [vmem:[#allocation3 + $0x2f8] sm:$0xff]
    %v291 = vld [vmem:[#allocation3 + $0x300] sm:$0xff]
    %v292 = vld [vmem:[#allocation3 + $0x308] sm:$0xff]
    %v293 = vld [vmem:[#allocation3 + $0x310] sm:$0xff]
    %v294 = vld [vmem:[#allocation3 + $0x318] sm:$0xff]
    %v295 = vld [vmem:[#allocation3 + $0x320] sm:$0xff]
    %v296 = vld [vmem:[#allocation3 + $0x328] sm:$0xff]
    %v297 = vld [vmem:[#allocation3 + $0x330] sm:$0xff]
    %v298 = vld [vmem:[#allocation3 + $0x338] sm:$0xff]
    %v299 = vld [vmem:[#allocation3 + $0x340] sm:$0xff]
    %v300 = vld [vmem:[#allocation3 + $0x348] sm:$0xff]
    %v301 = vld [vmem:[#allocation3 + $0x350] sm:$0xff]
    %v302 = vld [vmem:[#allocation3 + $0x358] sm:$0xff]
    %v303 = vld [vmem:[#allocation3 + $0x360] sm:$0xff]
    %v304 = vld [vmem:[#allocation3 + $0x368] sm:$0xff]
    %v305 = vld [vmem:[#allocation3 + $0x370] sm:$0xff]
    %v306 = vld [vmem:[#allocation3 + $0x378] sm:$0xff]
    %v307 = vld [vmem:[#allocation3 + $0x380] sm:$0xff]
    %v308 = vld [vmem:[#allocation3 + $0x388] sm:$0xff]
    %v309 = vld [vmem:[#allocation3 + $0x390] sm:$0xff]
    %v310 = vld [vmem:[#allocation3 + $0x398] sm:$0xff]
    %v311 = vld [vmem:[#allocation3 + $0x3a0] sm:$0xff]
    %v312 = vld [vmem:[#allocation3 + $0x3a8] sm:$0xff]
    %v313 = vld [vmem:[#allocation3 + $0x3b0] sm:$0xff]
    %v314 = vld [vmem:[#allocation3 + $0x3b8] sm:$0xff]
    %v315 = vld [vmem:[#allocation3 + $0x3c0] sm:$0xff]
    %v316 = vld [vmem:[#allocation3 + $0x3c8] sm:$0xff]
    %v317 = vld [vmem:[#allocation3 + $0x3d0] sm:$0xff]
    %v318 = vld [vmem:[#allocation3 + $0x3d8] sm:$0xff]
    %v319 = vld [vmem:[#allocation3 + $0x3e0] sm:$0xff]
    %v320 = vld [vmem:[#allocation3 + $0x3e8] sm:$0xff]
    %v321 = vld [vmem:[#allocation3 + $0x3f0] sm:$0xff]
    %v322 = vld [vmem:[#allocation3 + $0x3f8] sm:$0xff]
    %v323 = vld [vmem:[#allocation3 + $0x400] sm:$0xff]
    %v324 = vld [vmem:[#allocation3 + $0x408] sm:$0xff]
    %v325 = vld [vmem:[#allocation3 + $0x410] sm:$0xff]
    %v326 = vld [vmem:[#allocation3 + $0x418] sm:$0xff]
    %v327 = vld [vmem:[#allocation3 + $0x420] sm:$0xff]
    %v328 = vld [vmem:[#allocation3 + $0x428] sm:$0xff]
    %v329 = vld [vmem:[#allocation3 + $0x430] sm:$0xff]
    %v330 = vld [vmem:[#allocation3 + $0x438] sm:$0xff]
    %v331 = vld [vmem:[#allocation3 + $0x440] sm:$0xff]
    %v332 = vld [vmem:[#allocation3 + $0x448] sm:$0xff]
    %v333 = vld [vmem:[#allocation3 + $0x450] sm:$0xff]
    %v334 = vld [vmem:[#allocation3 + $0x458] sm:$0xff]
    %v335 = vld [vmem:[#allocation3 + $0x460] sm:$0xff]
    %v336 = vld [vmem:[#allocation3 + $0x468] sm:$0xff]
    %v337 = vld [vmem:[#allocation3 + $0x470] sm:$0xff]
    %v338 = vld [vmem:[#allocation3 + $0x478] sm:$0xff]
    %v339 = vld [vmem:[#allocation3 + $0x480] sm:$0xff]
    %v340 = vld [vmem:[#allocation3 + $0x488] sm:$0xff]
    %v341 = vld [vmem:[#allocation3 + $0x490] sm:$0xff]
    %v342 = vld [vmem:[#allocation3 + $0x498] sm:$0xff]
    %v343 = vld [vmem:[#allocation3 + $0x4a0] sm:$0xff]
    %v344 = vld [vmem:[#allocation3 + $0x4a8] sm:$0xff]
    %v345 = vld [vmem:[#allocation3 + $0x4b0] sm:$0xff]
    %v346 = vld [vmem:[#allocation3 + $0x4b8] sm:$0xff]
    %v347 = vld [vmem:[#allocation3 + $0x4c0] sm:$0xff]
    %v348 = vld [vmem:[#allocation3 + $0x4c8] sm:$0xff]
    %v349 = vld [vmem:[#allocation3 + $0x4d0] sm:$0xff]
    %v350 = vld [vmem:[#allocation3 + $0x4d8] sm:$0xff]
    %v351 = vld [vmem:[#allocation3 + $0x4e0] sm:$0xff]
    %v352 = vld [vmem:[#allocation3 + $0x4e8] sm:$0xff]
    %v353 = vld [vmem:[#allocation3 + $0x4f0] sm:$0xff]
    %v354 = vld [vmem:[#allocation3 + $0x4f8] sm:$0xff]
    %v355 = vld [vmem:[#allocation3 + $0x500] sm:$0xff]
    %v356 = vld [vmem:[#allocation3 + $0x508] sm:$0xff]
    %v357 = vld [vmem:[#allocation3 + $0x510] sm:$0xff]
    %v358 = vld [vmem:[#allocation3 + $0x518] sm:$0xff]
    %v359 = vld [vmem:[#allocation3 + $0x520] sm:$0xff]
    %v360 = vld [vmem:[#allocation3 + $0x528] sm:$0xff]
    %v361 = vld [vmem:[#allocation3 + $0x530] sm:$0xff]
    %v362 = vld [vmem:[#allocation3 + $0x538] sm:$0xff]
    %v363 = vld [vmem:[#allocation3 + $0x540] sm:$0xff]
    %v364 = vld [vmem:[#allocation3 + $0x548] sm:$0xff]
    %v365 = vld [vmem:[#allocation3 + $0x550] sm:$0xff]
    %v366 = vld [vmem:[#allocation3 + $0x558] sm:$0xff]
    %v367 = vld [vmem:[#allocation3 + $0x560] sm:$0xff]
    %v368 = vld [vmem:[#allocation3 + $0x568] sm:$0xff]
    %v369 = vld [vmem:[#allocation3 + $0x570] sm:$0xff]
    %v370 = vld [vmem:[#allocation3 + $0x578] sm:$0xff]
    %v371 = vld [vmem:[#allocation3 + $0x580] sm:$0xff]
    %v372 = vld [vmem:[#allocation3 + $0x588] sm:$0xff]
    %v373 = vld [vmem:[#allocation3 + $0x590] sm:$0xff]
    %v374 = vld [vmem:[#allocation3 + $0x598] sm:$0xff]
    %v375 = vld [vmem:[#allocation3 + $0x5a0] sm:$0xff]
    %v376 = vld [vmem:[#allocation3 + $0x5a8] sm:$0xff]
    %v377 = vld [vmem:[#allocation3 + $0x5b0] sm:$0xff]
    %v378 = vld [vmem:[#allocation3 + $0x5b8] sm:$0xff]
    %v379 = vld [vmem:[#allocation3 + $0x5c0] sm:$0xff]
    %v380 = vld [vmem:[#allocation3 + $0x5c8] sm:$0xff]
    %v381 = vld [vmem:[#allocation3 + $0x5d0] sm:$0xff]
    %v382 = vld [vmem:[#allocation3 + $0x5d8] sm:$0xff]
    %v383 = vld [vmem:[#allocation3 + $0x5e0] sm:$0xff]
    %v384 = vld [vmem:[#allocation3 + $0x5e8] sm:$0xff]
    %v385 = vld [vmem:[#allocation3 + $0x5f0] sm:$0xff]
    %v386 = vld [vmem:[#allocation3 + $0x5f8] sm:$0xff]
    %v387 = vld [vmem:[#allocation10] sm:$0xff]
    %v388 = vld [vmem:[#allocation10 + $0x8] sm:$0xf]
    %v391 = vlaneseq
    %v392 = vshrl.u32 %v391, 7
    %v393 = vsub.s32 0, %v392
    %v394 = vrot.slane %v387, %v393
    %v395 = vlaneseq
    %v396 = vshrl.u32 %v395, 7
    %v397 = vsub.s32 1, %v396
    %v398 = vrot.slane %v387, %v397
    %v399 = vlaneseq
    %v400 = vshrl.u32 %v399, 7
    %v401 = vsub.s32 2, %v400
    %v402 = vrot.slane %v387, %v401
    %v403 = vlaneseq
    %v404 = vshrl.u32 %v403, 7
    %v405 = vsub.s32 3, %v404
    %v406 = vrot.slane %v387, %v405
    %v407 = vlaneseq
    %v408 = vshrl.u32 %v407, 7
    %v409 = vsub.s32 4, %v408
    %v410 = vrot.slane %v387, %v409
    %v411 = vlaneseq
    %v412 = vshrl.u32 %v411, 7
    %v413 = vsub.s32 5, %v412
    %v414 = vrot.slane %v387, %v413
    %v415 = vlaneseq
    %v416 = vshrl.u32 %v415, 7
    %v417 = vsub.s32 6, %v416
    %v418 = vrot.slane %v387, %v417
    %v419 = vlaneseq
    %v420 = vshrl.u32 %v419, 7
    %v421 = vsub.s32 7, %v420
    %v422 = vrot.slane %v387, %v421
    %v423 = vlaneseq
    %v424 = vshrl.u32 %v423, 7
    %v425 = vsub.s32 0, %v424
    %v426 = vrot.slane %v388, %v425
    %v427 = vlaneseq
    %v428 = vshrl.u32 %v427, 7
    %v429 = vsub.s32 1, %v428
    %v430 = vrot.slane %v388, %v429
    %v431 = vlaneseq
    %v432 = vshrl.u32 %v431, 7
    %v433 = vsub.s32 2, %v432
    %v434 = vrot.slane %v388, %v433
    %v435 = vlaneseq
    %v436 = vshrl.u32 %v435, 7
    %v437 = vsub.s32 3, %v436
    %v438 = vrot.slane %v388, %v437
    %451 = vmatprep.subr.mxu0 %v376
    %452 = vmatpush1.msra.mxu0 %v375
    %453 = vmatprep.subr.mxu0 %v364
    %454 = vmatpush1.msra.mxu0 %v363
    %455 = vmatprep.subr.mxu0 %v352
    %456 = vmatpush1.msra.mxu0 %v351
    %457 = vmatprep.subr.mxu0 %v340
    %458 = vmatpush1.msra.mxu0 %v339
    %459 = vmatprep.subr.mxu0 %v328
    %460 = vmatpush1.msra.mxu0 %v327
    %461 = vmatprep.subr.mxu0 %v316
    %462 = vmatpush1.msra.mxu0 %v315
    %463 = vmatprep.subr.mxu0 %v304
    %464 = vmatpush1.msra.mxu0 %v303
    %465 = vmatprep.subr.mxu0 %v292
    %466 = vmatpush1.msra.mxu0 %v291
    %467 = vmatprep.subr.mxu0 %v280
    %468 = vmatpush1.msra.mxu0 %v279
    %469 = vmatprep.subr.mxu0 %v268
    %470 = vmatpush1.msra.mxu0 %v267
    %471 = vmatprep.subr.mxu0 %v256
    %472 = vmatpush1.msra.mxu0 %v255
    %473 = vmatprep.subr.mxu0 %v244
    %474 = vmatpush1.msra.mxu0 %v243
    %475 = vmatprep.subr.mxu0 %v232
    %476 = vmatpush1.msra.mxu0 %v231
    %477 = vmatprep.subr.mxu0 %v220
    %478 = vmatpush1.msra.mxu0 %v219
    %479 = vmatprep.subr.mxu0 %v208
    %480 = vmatpush1.msra.mxu0 %v207
    %481 = vmatprep.subr.mxu0 %v196
    %482 = vmatpush1.msra.mxu0 %v195
    %483 = vmatprep.subr.mxu0 0.0
    %484 = vmatpush2.msra.mxu0 0.0
    %485 = vmatprep.subr.mxu0 0.0
    %486 = vmatpush2.msra.mxu0 0.0
    %487 = vmatprep.subr.mxu0 0.0
    %488 = vmatpush2.msra.mxu0 0.0
    %489 = vmatprep.subr.mxu0 0.0
    %490 = vmatpush2.msra.mxu0 0.0
    %491 = vmatprep.subr.mxu0 0.0
    %492 = vmatpush2.msra.mxu0 0.0
    %493 = vmatprep.subr.mxu0 0.0
    %494 = vmatpush2.msra.mxu0 0.0
    %495 = vmatprep.subr.mxu0 0.0
    %496 = vmatpush2.msra.mxu0 0.0
    %497 = vmatprep.subr.mxu0 0.0
    %498 = vmatpush2.msra.mxu0 0.0
    %499 = vmatprep.subr.mxu0 0.0
    %500 = vmatpush2.msra.mxu0 0.0
    %501 = vmatprep.subr.mxu0 0.0
    %502 = vmatpush2.msra.mxu0 0.0
    %503 = vmatprep.subr.mxu0 0.0
    %504 = vmatpush2.msra.mxu0 0.0
    %505 = vmatprep.subr.mxu0 0.0
    %506 = vmatpush2.msra.mxu0 0.0
    %507 = vmatprep.subr.mxu0 0.0
    %508 = vmatpush2.msra.mxu0 0.0
    %509 = vmatprep.subr.mxu0 0.0
    %510 = vmatpush2.msra.mxu0 0.0
    %511 = vmatprep.subr.mxu0 0.0
    %512 = vmatpush2.msra.mxu0 0.0
    %513 = vmatprep.subr.mxu0 0.0
    %514 = vmatpush2.msra.mxu0 0.0
    %515 = vmatprep.mubr.f32.mxu0 0.0
    %516 = vmatmul.mubr.f32.gmra.mxu0 %v187
    %v517 = vpop.f32.mrf.mxu0
    %v518 = vadd.f32 %v394, %v517
    %v519 = vpop.f32.mrf.mxu0
    %v520 = vadd.f32 %v398, %v519
    %521 = vmatprep.mubr.f32.mxu0 0.0
    %522 = vmatmul.mubr.f32.gmra.mxu0 %v188
    %v523 = vpop.f32.mrf.mxu0
    %v524 = vadd.f32 %v394, %v523
    %v525 = vpop.f32.mrf.mxu0
    %v526 = vadd.f32 %v398, %v525
    %527 = vmatprep.mubr.f32.mxu0 0.0
    %528 = vmatmul.mubr.f32.gmra.mxu0 %v189
    %v529 = vpop.f32.mrf.mxu0
    %v530 = vadd.f32 %v394, %v529
    %v531 = vpop.f32.mrf.mxu0
    %v532 = vadd.f32 %v398, %v531
    %533 = vmatprep.mubr.f32.mxu0 0.0
    %534 = vmatmul.mubr.f32.gmra.mxu0 %v190
    %v535 = vpop.f32.mrf.mxu0
    %v536 = vadd.f32 %v394, %v535
    %v537 = vpop.f32.mrf.mxu0
    %v538 = vadd.f32 %v398, %v537
    %539 = vmatprep.mubr.f32.mxu0 0.0
    %540 = vmatmul.mubr.f32.gmra.mxu0 %v191
    %v541 = vpop.f32.mrf.mxu0
    %v542 = vadd.f32 %v394, %v541
    %v543 = vpop.f32.mrf.mxu0
    %v544 = vadd.f32 %v398, %v543
    %545 = vmatprep.mubr.f32.mxu0 0.0
    %546 = vmatmul.mubr.f32.gmra.mxu0 %v192
    %v547 = vpop.f32.mrf.mxu0
    %v548 = vadd.f32 %v394, %v547
    %v549 = vpop.f32.mrf.mxu0
    %v550 = vadd.f32 %v398, %v549
    %551 = vmatprep.mubr.f32.mxu0 0.0
    %552 = vmatmul.mubr.f32.gmra.mxu0 %v193
    %v553 = vpop.f32.mrf.mxu0
    %v554 = vadd.f32 %v394, %v553
    %v555 = vpop.f32.mrf.mxu0
    %v556 = vadd.f32 %v398, %v555
    %557 = vmatprep.mubr.f32.mxu0 0.0
    %558 = vmatmul.mubr.f32.gmra.mxu0 %v194
    %v559 = vpop.f32.mrf.mxu0
    %v560 = vadd.f32 %v394, %v559
    %v561 = vpop.f32.mrf.mxu0
    %v562 = vadd.f32 %v398, %v561
    %563 = vdwg.mxu0
    %564 = vmatprep.subr.mxu0 %v378
    %565 = vmatpush1.msra.mxu0 %v377
    %566 = vmatprep.subr.mxu0 %v366
    %567 = vmatpush1.msra.mxu0 %v365
    %568 = vmatprep.subr.mxu0 %v354
    %569 = vmatpush1.msra.mxu0 %v353
    %570 = vmatprep.subr.mxu0 %v342
    %571 = vmatpush1.msra.mxu0 %v341
    %572 = vmatprep.subr.mxu0 %v330
    %573 = vmatpush1.msra.mxu0 %v329
    %574 = vmatprep.subr.mxu0 %v318
    %575 = vmatpush1.msra.mxu0 %v317
    %576 = vmatprep.subr.mxu0 %v306
    %577 = vmatpush1.msra.mxu0 %v305
    %578 = vmatprep.subr.mxu0 %v294
    %579 = vmatpush1.msra.mxu0 %v293
    %580 = vmatprep.subr.mxu0 %v282
    %581 = vmatpush1.msra.mxu0 %v281
    %582 = vmatprep.subr.mxu0 %v270
    %583 = vmatpush1.msra.mxu0 %v269
    %584 = vmatprep.subr.mxu0 %v258
    %585 = vmatpush1.msra.mxu0 %v257
    %586 = vmatprep.subr.mxu0 %v246
    %587 = vmatpush1.msra.mxu0 %v245
    %588 = vmatprep.subr.mxu0 %v234
    %589 = vmatpush1.msra.mxu0 %v233
    %590 = vmatprep.subr.mxu0 %v222
    %591 = vmatpush1.msra.mxu0 %v221
    %592 = vmatprep.subr.mxu0 %v210
    %593 = vmatpush1.msra.mxu0 %v209
    %594 = vmatprep.subr.mxu0 %v198
    %595 = vmatpush1.msra.mxu0 %v197
    %596 = vmatprep.subr.mxu0 0.0
    %597 = vmatpush2.msra.mxu0 0.0
    %598 = vmatprep.subr.mxu0 0.0
    %599 = vmatpush2.msra.mxu0 0.0
    %600 = vmatprep.subr.mxu0 0.0
    %601 = vmatpush2.msra.mxu0 0.0
    %602 = vmatprep.subr.mxu0 0.0
    %603 = vmatpush2.msra.mxu0 0.0
    %604 = vmatprep.subr.mxu0 0.0
    %605 = vmatpush2.msra.mxu0 0.0
    %606 = vmatprep.subr.mxu0 0.0
    %607 = vmatpush2.msra.mxu0 0.0
    %608 = vmatprep.subr.mxu0 0.0
    %609 = vmatpush2.msra.mxu0 0.0
    %610 = vmatprep.subr.mxu0 0.0
    %611 = vmatpush2.msra.mxu0 0.0
    %612 = vmatprep.subr.mxu0 0.0
    %613 = vmatpush2.msra.mxu0 0.0
    %614 = vmatprep.subr.mxu0 0.0
    %615 = vmatpush2.msra.mxu0 0.0
    %616 = vmatprep.subr.mxu0 0.0
    %617 = vmatpush2.msra.mxu0 0.0
    %618 = vmatprep.subr.mxu0 0.0
    %619 = vmatpush2.msra.mxu0 0.0
    %620 = vmatprep.subr.mxu0 0.0
    %621 = vmatpush2.msra.mxu0 0.0
    %622 = vmatprep.subr.mxu0 0.0
    %623 = vmatpush2.msra.mxu0 0.0
    %624 = vmatprep.subr.mxu0 0.0
    %625 = vmatpush2.msra.mxu0 0.0
    %626 = vmatprep.subr.mxu0 0.0
    %627 = vmatpush2.msra.mxu0 0.0
    %628 = vmatprep.mubr.f32.mxu0 0.0
    %629 = vmatmul.mubr.f32.gmra.mxu0 %v187
    %v630 = vpop.f32.mrf.mxu0
    %v631 = vadd.f32 %v402, %v630
    %v632 = vpop.f32.mrf.mxu0
    %v633 = vadd.f32 %v406, %v632
    %634 = vmatprep.mubr.f32.mxu0 0.0
    %635 = vmatmul.mubr.f32.gmra.mxu0 %v188
    %v636 = vpop.f32.mrf.mxu0
    %v637 = vadd.f32 %v402, %v636
    %v638 = vpop.f32.mrf.mxu0
    %v639 = vadd.f32 %v406, %v638
    %640 = vmatprep.mubr.f32.mxu0 0.0
    %641 = vmatmul.mubr.f32.gmra.mxu0 %v189
    %v642 = vpop.f32.mrf.mxu0
    %v643 = vadd.f32 %v402, %v642
    %v644 = vpop.f32.mrf.mxu0
    %v645 = vadd.f32 %v406, %v644
    %646 = vmatprep.mubr.f32.mxu0 0.0
    %647 = vmatmul.mubr.f32.gmra.mxu0 %v190
    %v648 = vpop.f32.mrf.mxu0
    %v649 = vadd.f32 %v402, %v648
    %v650 = vpop.f32.mrf.mxu0
    %v651 = vadd.f32 %v406, %v650
    %652 = vmatprep.mubr.f32.mxu0 0.0
    %653 = vmatmul.mubr.f32.gmra.mxu0 %v191
    %v654 = vpop.f32.mrf.mxu0
    %v655 = vadd.f32 %v402, %v654
    %v656 = vpop.f32.mrf.mxu0
    %v657 = vadd.f32 %v406, %v656
    %658 = vmatprep.mubr.f32.mxu0 0.0
    %659 = vmatmul.mubr.f32.gmra.mxu0 %v192
    %v660 = vpop.f32.mrf.mxu0
    %v661 = vadd.f32 %v402, %v660
    %v662 = vpop.f32.mrf.mxu0
    %v663 = vadd.f32 %v406, %v662
    %664 = vmatprep.mubr.f32.mxu0 0.0
    %665 = vmatmul.mubr.f32.gmra.mxu0 %v193
    %v666 = vpop.f32.mrf.mxu0
    %v667 = vadd.f32 %v402, %v666
    %v668 = vpop.f32.mrf.mxu0
    %v669 = vadd.f32 %v406, %v668
    %670 = vmatprep.mubr.f32.mxu0 0.0
    %671 = vmatmul.mubr.f32.gmra.mxu0 %v194
    %v672 = vpop.f32.mrf.mxu0
    %v673 = vadd.f32 %v402, %v672
    %v674 = vpop.f32.mrf.mxu0
    %v675 = vadd.f32 %v406, %v674
    %676 = vdwg.mxu0
    %677 = vmatprep.subr.mxu0 %v380
    %678 = vmatpush1.msra.mxu0 %v379
    %679 = vmatprep.subr.mxu0 %v368
    %680 = vmatpush1.msra.mxu0 %v367
    %681 = vmatprep.subr.mxu0 %v356
    %682 = vmatpush1.msra.mxu0 %v355
    %683 = vmatprep.subr.mxu0 %v344
    %684 = vmatpush1.msra.mxu0 %v343
    %685 = vmatprep.subr.mxu0 %v332
    %686 = vmatpush1.msra.mxu0 %v331
    %687 = vmatprep.subr.mxu0 %v320
    %688 = vmatpush1.msra.mxu0 %v319
    %689 = vmatprep.subr.mxu0 %v308
    %690 = vmatpush1.msra.mxu0 %v307
    %691 = vmatprep.subr.mxu0 %v296
    %692 = vmatpush1.msra.mxu0 %v295
    %693 = vmatprep.subr.mxu0 %v284
    %694 = vmatpush1.msra.mxu0 %v283
    %695 = vmatprep.subr.mxu0 %v272
    %696 = vmatpush1.msra.mxu0 %v271
    %697 = vmatprep.subr.mxu0 %v260
    %698 = vmatpush1.msra.mxu0 %v259
    %699 = vmatprep.subr.mxu0 %v248
    %700 = vmatpush1.msra.mxu0 %v247
    %701 = vmatprep.subr.mxu0 %v236
    %702 = vmatpush1.msra.mxu0 %v235
    %703 = vmatprep.subr.mxu0 %v224
    %704 = vmatpush1.msra.mxu0 %v223
    %705 = vmatprep.subr.mxu0 %v212
    %706 = vmatpush1.msra.mxu0 %v211
    %707 = vmatprep.subr.mxu0 %v200
    %708 = vmatpush1.msra.mxu0 %v199
    %709 = vmatprep.subr.mxu0 0.0
    %710 = vmatpush2.msra.mxu0 0.0
    %711 = vmatprep.subr.mxu0 0.0
    %712 = vmatpush2.msra.mxu0 0.0
    %713 = vmatprep.subr.mxu0 0.0
    %714 = vmatpush2.msra.mxu0 0.0
    %715 = vmatprep.subr.mxu0 0.0
    %716 = vmatpush2.msra.mxu0 0.0
    %717 = vmatprep.subr.mxu0 0.0
    %718 = vmatpush2.msra.mxu0 0.0
    %719 = vmatprep.subr.mxu0 0.0
    %720 = vmatpush2.msra.mxu0 0.0
    %721 = vmatprep.subr.mxu0 0.0
    %722 = vmatpush2.msra.mxu0 0.0
    %723 = vmatprep.subr.mxu0 0.0
    %724 = vmatpush2.msra.mxu0 0.0
    %725 = vmatprep.subr.mxu0 0.0
    %726 = vmatpush2.msra.mxu0 0.0
    %727 = vmatprep.subr.mxu0 0.0
    %728 = vmatpush2.msra.mxu0 0.0
    %729 = vmatprep.subr.mxu0 0.0
    %730 = vmatpush2.msra.mxu0 0.0
    %731 = vmatprep.subr.mxu0 0.0
    %732 = vmatpush2.msra.mxu0 0.0
    %733 = vmatprep.subr.mxu0 0.0
    %734 = vmatpush2.msra.mxu0 0.0
    %735 = vmatprep.subr.mxu0 0.0
    %736 = vmatpush2.msra.mxu0 0.0
    %737 = vmatprep.subr.mxu0 0.0
    %738 = vmatpush2.msra.mxu0 0.0
    %739 = vmatprep.subr.mxu0 0.0
    %740 = vmatpush2.msra.mxu0 0.0
    %741 = vmatprep.mubr.f32.mxu0 0.0
    %742 = vmatmul.mubr.f32.gmra.mxu0 %v187
    %v743 = vpop.f32.mrf.mxu0
    %v744 = vadd.f32 %v410, %v743
    %v745 = vpop.f32.mrf.mxu0
    %v746 = vadd.f32 %v414, %v745
    %747 = vmatprep.mubr.f32.mxu0 0.0
    %748 = vmatmul.mubr.f32.gmra.mxu0 %v188
    %v749 = vpop.f32.mrf.mxu0
    %v750 = vadd.f32 %v410, %v749
    %v751 = vpop.f32.mrf.mxu0
    %v752 = vadd.f32 %v414, %v751
    %753 = vmatprep.mubr.f32.mxu0 0.0
    %754 = vmatmul.mubr.f32.gmra.mxu0 %v189
    %v755 = vpop.f32.mrf.mxu0
    %v756 = vadd.f32 %v410, %v755
    %v757 = vpop.f32.mrf.mxu0
    %v758 = vadd.f32 %v414, %v757
    %759 = vmatprep.mubr.f32.mxu0 0.0
    %760 = vmatmul.mubr.f32.gmra.mxu0 %v190
    %v761 = vpop.f32.mrf.mxu0
    %v762 = vadd.f32 %v410, %v761
    %v763 = vpop.f32.mrf.mxu0
    %v764 = vadd.f32 %v414, %v763
    %765 = vmatprep.mubr.f32.mxu0 0.0
    %766 = vmatmul.mubr.f32.gmra.mxu0 %v191
    %v767 = vpop.f32.mrf.mxu0
    %v768 = vadd.f32 %v410, %v767
    %v769 = vpop.f32.mrf.mxu0
    %v770 = vadd.f32 %v414, %v769
    %771 = vmatprep.mubr.f32.mxu0 0.0
    %772 = vmatmul.mubr.f32.gmra.mxu0 %v192
    %v773 = vpop.f32.mrf.mxu0
    %v774 = vadd.f32 %v410, %v773
    %v775 = vpop.f32.mrf.mxu0
    %v776 = vadd.f32 %v414, %v775
    %777 = vmatprep.mubr.f32.mxu0 0.0
    %778 = vmatmul.mubr.f32.gmra.mxu0 %v193
    %v779 = vpop.f32.mrf.mxu0
    %v780 = vadd.f32 %v410, %v779
    %v781 = vpop.f32.mrf.mxu0
    %v782 = vadd.f32 %v414, %v781
    %783 = vmatprep.mubr.f32.mxu0 0.0
    %784 = vmatmul.mubr.f32.gmra.mxu0 %v194
    %v785 = vpop.f32.mrf.mxu0
    %v786 = vadd.f32 %v410, %v785
    %v787 = vpop.f32.mrf.mxu0
    %v788 = vadd.f32 %v414, %v787
    %789 = vdwg.mxu0
    %790 = vmatprep.subr.mxu0 %v382
    %791 = vmatpush1.msra.mxu0 %v381
    %792 = vmatprep.subr.mxu0 %v370
    %793 = vmatpush1.msra.mxu0 %v369
    %794 = vmatprep.subr.mxu0 %v358
    %795 = vmatpush1.msra.mxu0 %v357
    %796 = vmatprep.subr.mxu0 %v346
    %797 = vmatpush1.msra.mxu0 %v345
    %798 = vmatprep.subr.mxu0 %v334
    %799 = vmatpush1.msra.mxu0 %v333
    %800 = vmatprep.subr.mxu0 %v322
    %801 = vmatpush1.msra.mxu0 %v321
    %802 = vmatprep.subr.mxu0 %v310
    %803 = vmatpush1.msra.mxu0 %v309
    %804 = vmatprep.subr.mxu0 %v298
    %805 = vmatpush1.msra.mxu0 %v297
    %806 = vmatprep.subr.mxu0 %v286
    %807 = vmatpush1.msra.mxu0 %v285
    %808 = vmatprep.subr.mxu0 %v274
    %809 = vmatpush1.msra.mxu0 %v273
    %810 = vmatprep.subr.mxu0 %v262
    %811 = vmatpush1.msra.mxu0 %v261
    %812 = vmatprep.subr.mxu0 %v250
    %813 = vmatpush1.msra.mxu0 %v249
    %814 = vmatprep.subr.mxu0 %v238
    %815 = vmatpush1.msra.mxu0 %v237
    %816 = vmatprep.subr.mxu0 %v226
    %817 = vmatpush1.msra.mxu0 %v225
    %818 = vmatprep.subr.mxu0 %v214
    %819 = vmatpush1.msra.mxu0 %v213
    %820 = vmatprep.subr.mxu0 %v202
    %821 = vmatpush1.msra.mxu0 %v201
    %822 = vmatprep.subr.mxu0 0.0
    %823 = vmatpush2.msra.mxu0 0.0
    %824 = vmatprep.subr.mxu0 0.0
    %825 = vmatpush2.msra.mxu0 0.0
    %826 = vmatprep.subr.mxu0 0.0
    %827 = vmatpush2.msra.mxu0 0.0
    %828 = vmatprep.subr.mxu0 0.0
    %829 = vmatpush2.msra.mxu0 0.0
    %830 = vmatprep.subr.mxu0 0.0
    %831 = vmatpush2.msra.mxu0 0.0
    %832 = vmatprep.subr.mxu0 0.0
    %833 = vmatpush2.msra.mxu0 0.0
    %834 = vmatprep.subr.mxu0 0.0
    %835 = vmatpush2.msra.mxu0 0.0
    %836 = vmatprep.subr.mxu0 0.0
    %837 = vmatpush2.msra.mxu0 0.0
    %838 = vmatprep.subr.mxu0 0.0
    %839 = vmatpush2.msra.mxu0 0.0
    %840 = vmatprep.subr.mxu0 0.0
    %841 = vmatpush2.msra.mxu0 0.0
    %842 = vmatprep.subr.mxu0 0.0
    %843 = vmatpush2.msra.mxu0 0.0
    %844 = vmatprep.subr.mxu0 0.0
    %845 = vmatpush2.msra.mxu0 0.0
    %846 = vmatprep.subr.mxu0 0.0
    %847 = vmatpush2.msra.mxu0 0.0
    %848 = vmatprep.subr.mxu0 0.0
    %849 = vmatpush2.msra.mxu0 0.0
    %850 = vmatprep.subr.mxu0 0.0
    %851 = vmatpush2.msra.mxu0 0.0
    %852 = vmatprep.subr.mxu0 0.0
    %853 = vmatpush2.msra.mxu0 0.0
    %854 = vmatprep.mubr.f32.mxu0 0.0
    %855 = vmatmul.mubr.f32.gmra.mxu0 %v187
    %v856 = vpop.f32.mrf.mxu0
    %v857 = vadd.f32 %v418, %v856
    %v858 = vpop.f32.mrf.mxu0
    %v859 = vadd.f32 %v422, %v858
    %860 = vmatprep.mubr.f32.mxu0 0.0
    %861 = vmatmul.mubr.f32.gmra.mxu0 %v188
    %v862 = vpop.f32.mrf.mxu0
    %v863 = vadd.f32 %v418, %v862
    %v864 = vpop.f32.mrf.mxu0
    %v865 = vadd.f32 %v422, %v864
    %866 = vmatprep.mubr.f32.mxu0 0.0
    %867 = vmatmul.mubr.f32.gmra.mxu0 %v189
    %v868 = vpop.f32.mrf.mxu0
    %v869 = vadd.f32 %v418, %v868
    %v870 = vpop.f32.mrf.mxu0
    %v871 = vadd.f32 %v422, %v870
    %872 = vmatprep.mubr.f32.mxu0 0.0
    %873 = vmatmul.mubr.f32.gmra.mxu0 %v190
    %v874 = vpop.f32.mrf.mxu0
    %v875 = vadd.f32 %v418, %v874
    %v876 = vpop.f32.mrf.mxu0
    %v877 = vadd.f32 %v422, %v876
    %878 = vmatprep.mubr.f32.mxu0 0.0
    %879 = vmatmul.mubr.f32.gmra.mxu0 %v191
    %v880 = vpop.f32.mrf.mxu0
    %v881 = vadd.f32 %v418, %v880
    %v882 = vpop.f32.mrf.mxu0
    %v883 = vadd.f32 %v422, %v882
    %884 = vmatprep.mubr.f32.mxu0 0.0
    %885 = vmatmul.mubr.f32.gmra.mxu0 %v192
    %v886 = vpop.f32.mrf.mxu0
    %v887 = vadd.f32 %v418, %v886
    %v888 = vpop.f32.mrf.mxu0
    %v889 = vadd.f32 %v422, %v888
    %890 = vmatprep.mubr.f32.mxu0 0.0
    %891 = vmatmul.mubr.f32.gmra.mxu0 %v193
    %v892 = vpop.f32.mrf.mxu0
    %v893 = vadd.f32 %v418, %v892
    %v894 = vpop.f32.mrf.mxu0
    %v895 = vadd.f32 %v422, %v894
    %896 = vmatprep.mubr.f32.mxu0 0.0
    %897 = vmatmul.mubr.f32.gmra.mxu0 %v194
    %v898 = vpop.f32.mrf.mxu0
    %v899 = vadd.f32 %v418, %v898
    %v900 = vpop.f32.mrf.mxu0
    %v901 = vadd.f32 %v422, %v900
    %902 = vdwg.mxu0
    %903 = vmatprep.subr.mxu0 %v384
    %904 = vmatpush1.msra.mxu0 %v383
    %905 = vmatprep.subr.mxu0 %v372
    %906 = vmatpush1.msra.mxu0 %v371
    %907 = vmatprep.subr.mxu0 %v360
    %908 = vmatpush1.msra.mxu0 %v359
    %909 = vmatprep.subr.mxu0 %v348
    %910 = vmatpush1.msra.mxu0 %v347
    %911 = vmatprep.subr.mxu0 %v336
    %912 = vmatpush1.msra.mxu0 %v335
    %913 = vmatprep.subr.mxu0 %v324
    %914 = vmatpush1.msra.mxu0 %v323
    %915 = vmatprep.subr.mxu0 %v312
    %916 = vmatpush1.msra.mxu0 %v311
    %917 = vmatprep.subr.mxu0 %v300
    %918 = vmatpush1.msra.mxu0 %v299
    %919 = vmatprep.subr.mxu0 %v288
    %920 = vmatpush1.msra.mxu0 %v287
    %921 = vmatprep.subr.mxu0 %v276
    %922 = vmatpush1.msra.mxu0 %v275
    %923 = vmatprep.subr.mxu0 %v264
    %924 = vmatpush1.msra.mxu0 %v263
    %925 = vmatprep.subr.mxu0 %v252
    %926 = vmatpush1.msra.mxu0 %v251
    %927 = vmatprep.subr.mxu0 %v240
    %928 = vmatpush1.msra.mxu0 %v239
    %929 = vmatprep.subr.mxu0 %v228
    %930 = vmatpush1.msra.mxu0 %v227
    %931 = vmatprep.subr.mxu0 %v216
    %932 = vmatpush1.msra.mxu0 %v215
    %933 = vmatprep.subr.mxu0 %v204
    %934 = vmatpush1.msra.mxu0 %v203
    %935 = vmatprep.subr.mxu0 0.0
    %936 = vmatpush2.msra.mxu0 0.0
    %937 = vmatprep.subr.mxu0 0.0
    %938 = vmatpush2.msra.mxu0 0.0
    %939 = vmatprep.subr.mxu0 0.0
    %940 = vmatpush2.msra.mxu0 0.0
    %941 = vmatprep.subr.mxu0 0.0
    %942 = vmatpush2.msra.mxu0 0.0
    %943 = vmatprep.subr.mxu0 0.0
    %944 = vmatpush2.msra.mxu0 0.0
    %945 = vmatprep.subr.mxu0 0.0
    %946 = vmatpush2.msra.mxu0 0.0
    %947 = vmatprep.subr.mxu0 0.0
    %948 = vmatpush2.msra.mxu0 0.0
    %949 = vmatprep.subr.mxu0 0.0
    %950 = vmatpush2.msra.mxu0 0.0
    %951 = vmatprep.subr.mxu0 0.0
    %952 = vmatpush2.msra.mxu0 0.0
    %953 = vmatprep.subr.mxu0 0.0
    %954 = vmatpush2.msra.mxu0 0.0
    %955 = vmatprep.subr.mxu0 0.0
    %956 = vmatpush2.msra.mxu0 0.0
    %957 = vmatprep.subr.mxu0 0.0
    %958 = vmatpush2.msra.mxu0 0.0
    %959 = vmatprep.subr.mxu0 0.0
    %960 = vmatpush2.msra.mxu0 0.0
    %961 = vmatprep.subr.mxu0 0.0
    %962 = vmatpush2.msra.mxu0 0.0
    %963 = vmatprep.subr.mxu0 0.0
    %964 = vmatpush2.msra.mxu0 0.0
    %965 = vmatprep.subr.mxu0 0.0
    %966 = vmatpush2.msra.mxu0 0.0
    %967 = vmatprep.mubr.f32.mxu0 0.0
    %968 = vmatmul.mubr.f32.gmra.mxu0 %v187
    %v969 = vpop.f32.mrf.mxu0
    %v970 = vadd.f32 %v426, %v969
    %v971 = vpop.f32.mrf.mxu0
    %v972 = vadd.f32 %v430, %v971
    %973 = vmatprep.mubr.f32.mxu0 0.0
    %974 = vmatmul.mubr.f32.gmra.mxu0 %v188
    %v975 = vpop.f32.mrf.mxu0
    %v976 = vadd.f32 %v426, %v975
    %v977 = vpop.f32.mrf.mxu0
    %v978 = vadd.f32 %v430, %v977
    %979 = vmatprep.mubr.f32.mxu0 0.0
    %980 = vmatmul.mubr.f32.gmra.mxu0 %v189
    %v981 = vpop.f32.mrf.mxu0
    %v982 = vadd.f32 %v426, %v981
    %v983 = vpop.f32.mrf.mxu0
    %v984 = vadd.f32 %v430, %v983
    %985 = vmatprep.mubr.f32.mxu0 0.0
    %986 = vmatmul.mubr.f32.gmra.mxu0 %v190
    %v987 = vpop.f32.mrf.mxu0
    %v988 = vadd.f32 %v426, %v987
    %v989 = vpop.f32.mrf.mxu0
    %v990 = vadd.f32 %v430, %v989
    %991 = vmatprep.mubr.f32.mxu0 0.0
    %992 = vmatmul.mubr.f32.gmra.mxu0 %v191
    %v993 = vpop.f32.mrf.mxu0
    %v994 = vadd.f32 %v426, %v993
    %v995 = vpop.f32.mrf.mxu0
    %v996 = vadd.f32 %v430, %v995
    %997 = vmatprep.mubr.f32.mxu0 0.0
    %998 = vmatmul.mubr.f32.gmra.mxu0 %v192
    %v999 = vpop.f32.mrf.mxu0
    %v1000 = vadd.f32 %v426, %v999
    %v1001 = vpop.f32.mrf.mxu0
    %v1002 = vadd.f32 %v430, %v1001
    %1003 = vmatprep.mubr.f32.mxu0 0.0
    %1004 = vmatmul.mubr.f32.gmra.mxu0 %v193
    %v1005 = vpop.f32.mrf.mxu0
    %v1006 = vadd.f32 %v426, %v1005
    %v1007 = vpop.f32.mrf.mxu0
    %v1008 = vadd.f32 %v430, %v1007
    %1009 = vmatprep.mubr.f32.mxu0 0.0
    %1010 = vmatmul.mubr.f32.gmra.mxu0 %v194
    %v1011 = vpop.f32.mrf.mxu0
    %v1012 = vadd.f32 %v426, %v1011
    %v1013 = vpop.f32.mrf.mxu0
    %v1014 = vadd.f32 %v430, %v1013
    %1015 = vdwg.mxu0
    %1016 = vmatprep.subr.mxu0 %v386
    %1017 = vmatpush1.msra.mxu0 %v385
    %1018 = vmatprep.subr.mxu0 %v374
    %1019 = vmatpush1.msra.mxu0 %v373
    %1020 = vmatprep.subr.mxu0 %v362
    %1021 = vmatpush1.msra.mxu0 %v361
    %1022 = vmatprep.subr.mxu0 %v350
    %1023 = vmatpush1.msra.mxu0 %v349
    %1024 = vmatprep.subr.mxu0 %v338
    %1025 = vmatpush1.msra.mxu0 %v337
    %1026 = vmatprep.subr.mxu0 %v326
    %1027 = vmatpush1.msra.mxu0 %v325
    %1028 = vmatprep.subr.mxu0 %v314
    %1029 = vmatpush1.msra.mxu0 %v313
    %1030 = vmatprep.subr.mxu0 %v302
    %1031 = vmatpush1.msra.mxu0 %v301
    %1032 = vmatprep.subr.mxu0 %v290
    %1033 = vmatpush1.msra.mxu0 %v289
    %1034 = vmatprep.subr.mxu0 %v278
    %1035 = vmatpush1.msra.mxu0 %v277
    %1036 = vmatprep.subr.mxu0 %v266
    %1037 = vmatpush1.msra.mxu0 %v265
    %1038 = vmatprep.subr.mxu0 %v254
    %1039 = vmatpush1.msra.mxu0 %v253
    %1040 = vmatprep.subr.mxu0 %v242
    %1041 = vmatpush1.msra.mxu0 %v241
    %1042 = vmatprep.subr.mxu0 %v230
    %1043 = vmatpush1.msra.mxu0 %v229
    %1044 = vmatprep.subr.mxu0 %v218
    %1045 = vmatpush1.msra.mxu0 %v217
    %1046 = vmatprep.subr.mxu0 %v206
    %1047 = vmatpush1.msra.mxu0 %v205
    %1048 = vmatprep.subr.mxu0 0.0
    %1049 = vmatpush2.msra.mxu0 0.0
    %1050 = vmatprep.subr.mxu0 0.0
    %1051 = vmatpush2.msra.mxu0 0.0
    %1052 = vmatprep.subr.mxu0 0.0
    %1053 = vmatpush2.msra.mxu0 0.0
    %1054 = vmatprep.subr.mxu0 0.0
    %1055 = vmatpush2.msra.mxu0 0.0
    %1056 = vmatprep.subr.mxu0 0.0
    %1057 = vmatpush2.msra.mxu0 0.0
    %1058 = vmatprep.subr.mxu0 0.0
    %1059 = vmatpush2.msra.mxu0 0.0
    %1060 = vmatprep.subr.mxu0 0.0
    %1061 = vmatpush2.msra.mxu0 0.0
    %1062 = vmatprep.subr.mxu0 0.0
    %1063 = vmatpush2.msra.mxu0 0.0
    %1064 = vmatprep.subr.mxu0 0.0
    %1065 = vmatpush2.msra.mxu0 0.0
    %1066 = vmatprep.subr.mxu0 0.0
    %1067 = vmatpush2.msra.mxu0 0.0
    %1068 = vmatprep.subr.mxu0 0.0
    %1069 = vmatpush2.msra.mxu0 0.0
    %1070 = vmatprep.subr.mxu0 0.0
    %1071 = vmatpush2.msra.mxu0 0.0
    %1072 = vmatprep.subr.mxu0 0.0
    %1073 = vmatpush2.msra.mxu0 0.0
    %1074 = vmatprep.subr.mxu0 0.0
    %1075 = vmatpush2.msra.mxu0 0.0
    %1076 = vmatprep.subr.mxu0 0.0
    %1077 = vmatpush2.msra.mxu0 0.0
    %1078 = vmatprep.subr.mxu0 0.0
    %1079 = vmatpush2.msra.mxu0 0.0
    %1080 = vmatprep.mubr.f32.mxu0 0.0
    %1081 = vmatmul.mubr.f32.gmra.mxu0 %v187
    %v1082 = vpop.f32.mrf.mxu0
    %v1083 = vadd.f32 %v434, %v1082
    %v1084 = vpop.f32.mrf.mxu0
    %v1085 = vadd.f32 %v438, %v1084
    %1086 = vmatprep.mubr.f32.mxu0 0.0
    %1087 = vmatmul.mubr.f32.gmra.mxu0 %v188
    %v1088 = vpop.f32.mrf.mxu0
    %v1089 = vadd.f32 %v434, %v1088
    %v1090 = vpop.f32.mrf.mxu0
    %v1091 = vadd.f32 %v438, %v1090
    %1092 = vmatprep.mubr.f32.mxu0 0.0
    %1093 = vmatmul.mubr.f32.gmra.mxu0 %v189
    %v1094 = vpop.f32.mrf.mxu0
    %v1095 = vadd.f32 %v434, %v1094
    %v1096 = vpop.f32.mrf.mxu0
    %v1097 = vadd.f32 %v438, %v1096
    %1098 = vmatprep.mubr.f32.mxu0 0.0
    %1099 = vmatmul.mubr.f32.gmra.mxu0 %v190
    %v1100 = vpop.f32.mrf.mxu0
    %v1101 = vadd.f32 %v434, %v1100
    %v1102 = vpop.f32.mrf.mxu0
    %v1103 = vadd.f32 %v438, %v1102
    %1104 = vmatprep.mubr.f32.mxu0 0.0
    %1105 = vmatmul.mubr.f32.gmra.mxu0 %v191
    %v1106 = vpop.f32.mrf.mxu0
    %v1107 = vadd.f32 %v434, %v1106
    %v1108 = vpop.f32.mrf.mxu0
    %v1109 = vadd.f32 %v438, %v1108
    %1110 = vmatprep.mubr.f32.mxu0 0.0
    %1111 = vmatmul.mubr.f32.gmra.mxu0 %v192
    %v1112 = vpop.f32.mrf.mxu0
    %v1113 = vadd.f32 %v434, %v1112
    %v1114 = vpop.f32.mrf.mxu0
    %v1115 = vadd.f32 %v438, %v1114
    %1116 = vmatprep.mubr.f32.mxu0 0.0
    %1117 = vmatmul.mubr.f32.gmra.mxu0 %v193
    %v1118 = vpop.f32.mrf.mxu0
    %v1119 = vadd.f32 %v434, %v1118
    %v1120 = vpop.f32.mrf.mxu0
    %v1121 = vadd.f32 %v438, %v1120
    %1122 = vmatprep.mubr.f32.mxu0 0.0
    %1123 = vmatmul.mubr.f32.gmra.mxu0 %v194
    %v1124 = vpop.f32.mrf.mxu0
    %v1125 = vadd.f32 %v434, %v1124
    %v1126 = vpop.f32.mrf.mxu0
    %v1127 = vadd.f32 %v438, %v1126
    %1128 = vdwg.mxu0
    %1129 = vst [vmem:[#allocation2] sm:$0xff] %v518
    %1130 = vst [vmem:[#allocation2 + $0x8] sm:$0xff] %v520
    %1131 = vst [vmem:[#allocation2 + $0x10] sm:$0xff] %v631
    %1132 = vst [vmem:[#allocation2 + $0x18] sm:$0xff] %v633
    %1133 = vst [vmem:[#allocation2 + $0x20] sm:$0xff] %v744
    %1134 = vst [vmem:[#allocation2 + $0x28] sm:$0xff] %v746
    %1135 = vst [vmem:[#allocation2 + $0x30] sm:$0xff] %v857
    %1136 = vst [vmem:[#allocation2 + $0x38] sm:$0xff] %v859
    %1137 = vst [vmem:[#allocation2 + $0x40] sm:$0xff] %v970
    %1138 = vst [vmem:[#allocation2 + $0x48] sm:$0xff] %v972
    %1139 = vst [vmem:[#allocation2 + $0x50] sm:$0xff] %v1083
    %1140 = vst [vmem:[#allocation2 + $0x58] sm:$0xff] %v1085
    %1141 = vst [vmem:[#allocation2 + $0x60] sm:$0xff] %v524
    %1142 = vst [vmem:[#allocation2 + $0x68] sm:$0xff] %v526
    %1143 = vst [vmem:[#allocation2 + $0x70] sm:$0xff] %v637
    %1144 = vst [vmem:[#allocation2 + $0x78] sm:$0xff] %v639
    %1145 = vst [vmem:[#allocation2 + $0x80] sm:$0xff] %v750
    %1146 = vst [vmem:[#allocation2 + $0x88] sm:$0xff] %v752
    %1147 = vst [vmem:[#allocation2 + $0x90] sm:$0xff] %v863
    %1148 = vst [vmem:[#allocation2 + $0x98] sm:$0xff] %v865
    %1149 = vst [vmem:[#allocation2 + $0xa0] sm:$0xff] %v976
    %1150 = vst [vmem:[#allocation2 + $0xa8] sm:$0xff] %v978
    %1151 = vst [vmem:[#allocation2 + $0xb0] sm:$0xff] %v1089
    %1152 = vst [vmem:[#allocation2 + $0xb8] sm:$0xff] %v1091
    %1153 = vst [vmem:[#allocation2 + $0xc0] sm:$0xff] %v530
    %1154 = vst [vmem:[#allocation2 + $0xc8] sm:$0xff] %v532
    %1155 = vst [vmem:[#allocation2 + $0xd0] sm:$0xff] %v643
    %1156 = vst [vmem:[#allocation2 + $0xd8] sm:$0xff] %v645
    %1157 = vst [vmem:[#allocation2 + $0xe0] sm:$0xff] %v756
    %1158 = vst [vmem:[#allocation2 + $0xe8] sm:$0xff] %v758
    %1159 = vst [vmem:[#allocation2 + $0xf0] sm:$0xff] %v869
    %1160 = vst [vmem:[#allocation2 + $0xf8] sm:$0xff] %v871
    %1161 = vst [vmem:[#allocation2 + $0x100] sm:$0xff] %v982
    %1162 = vst [vmem:[#allocation2 + $0x108] sm:$0xff] %v984
    %1163 = vst [vmem:[#allocation2 + $0x110] sm:$0xff] %v1095
    %1164 = vst [vmem:[#allocation2 + $0x118] sm:$0xff] %v1097
    %1165 = vst [vmem:[#allocation2 + $0x120] sm:$0xff] %v536
    %1166 = vst [vmem:[#allocation2 + $0x128] sm:$0xff] %v538
    %1167 = vst [vmem:[#allocation2 + $0x130] sm:$0xff] %v649
    %1168 = vst [vmem:[#allocation2 + $0x138] sm:$0xff] %v651
    %1169 = vst [vmem:[#allocation2 + $0x140] sm:$0xff] %v762
    %1170 = vst [vmem:[#allocation2 + $0x148] sm:$0xff] %v764
    %1171 = vst [vmem:[#allocation2 + $0x150] sm:$0xff] %v875
    %1172 = vst [vmem:[#allocation2 + $0x158] sm:$0xff] %v877
    %1173 = vst [vmem:[#allocation2 + $0x160] sm:$0xff] %v988
    %1174 = vst [vmem:[#allocation2 + $0x168] sm:$0xff] %v990
    %1175 = vst [vmem:[#allocation2 + $0x170] sm:$0xff] %v1101
    %1176 = vst [vmem:[#allocation2 + $0x178] sm:$0xff] %v1103
    %1177 = vst [vmem:[#allocation2 + $0x180] sm:$0xff] %v542
    %1178 = vst [vmem:[#allocation2 + $0x188] sm:$0xff] %v544
    %1179 = vst [vmem:[#allocation2 + $0x190] sm:$0xff] %v655
    %1180 = vst [vmem:[#allocation2 + $0x198] sm:$0xff] %v657
    %1181 = vst [vmem:[#allocation2 + $0x1a0] sm:$0xff] %v768
    %1182 = vst [vmem:[#allocation2 + $0x1a8] sm:$0xff] %v770
    %1183 = vst [vmem:[#allocation2 + $0x1b0] sm:$0xff] %v881
    %1184 = vst [vmem:[#allocation2 + $0x1b8] sm:$0xff] %v883
    %1185 = vst [vmem:[#allocation2 + $0x1c0] sm:$0xff] %v994
    %1186 = vst [vmem:[#allocation2 + $0x1c8] sm:$0xff] %v996
    %1187 = vst [vmem:[#allocation2 + $0x1d0] sm:$0xff] %v1107
    %1188 = vst [vmem:[#allocation2 + $0x1d8] sm:$0xff] %v1109
    %1189 = vst [vmem:[#allocation2 + $0x1e0] sm:$0xff] %v548
    %1190 = vst [vmem:[#allocation2 + $0x1e8] sm:$0xff] %v550
    %1191 = vst [vmem:[#allocation2 + $0x1f0] sm:$0xff] %v661
    %1192 = vst [vmem:[#allocation2 + $0x1f8] sm:$0xff] %v663
    %1193 = vst [vmem:[#allocation2 + $0x200] sm:$0xff] %v774
    %1194 = vst [vmem:[#allocation2 + $0x208] sm:$0xff] %v776
    %1195 = vst [vmem:[#allocation2 + $0x210] sm:$0xff] %v887
    %1196 = vst [vmem:[#allocation2 + $0x218] sm:$0xff] %v889
    %1197 = vst [vmem:[#allocation2 + $0x220] sm:$0xff] %v1000
    %1198 = vst [vmem:[#allocation2 + $0x228] sm:$0xff] %v1002
    %1199 = vst [vmem:[#allocation2 + $0x230] sm:$0xff] %v1113
    %1200 = vst [vmem:[#allocation2 + $0x238] sm:$0xff] %v1115
    %1201 = vst [vmem:[#allocation2 + $0x240] sm:$0xff] %v554
    %1202 = vst [vmem:[#allocation2 + $0x248] sm:$0xff] %v556
    %1203 = vst [vmem:[#allocation2 + $0x250] sm:$0xff] %v667
    %1204 = vst [vmem:[#allocation2 + $0x258] sm:$0xff] %v669
    %1205 = vst [vmem:[#allocation2 + $0x260] sm:$0xff] %v780
    %1206 = vst [vmem:[#allocation2 + $0x268] sm:$0xff] %v782
    %1207 = vst [vmem:[#allocation2 + $0x270] sm:$0xff] %v893
    %1208 = vst [vmem:[#allocation2 + $0x278] sm:$0xff] %v895
    %1209 = vst [vmem:[#allocation2 + $0x280] sm:$0xff] %v1006
    %1210 = vst [vmem:[#allocation2 + $0x288] sm:$0xff] %v1008
    %1211 = vst [vmem:[#allocation2 + $0x290] sm:$0xff] %v1119
    %1212 = vst [vmem:[#allocation2 + $0x298] sm:$0xff] %v1121
    %1213 = vst [vmem:[#allocation2 + $0x2a0] sm:$0xff] %v560
    %1214 = vst [vmem:[#allocation2 + $0x2a8] sm:$0xff] %v562
    %1215 = vst [vmem:[#allocation2 + $0x2b0] sm:$0xff] %v673
    %1216 = vst [vmem:[#allocation2 + $0x2b8] sm:$0xff] %v675
    %1217 = vst [vmem:[#allocation2 + $0x2c0] sm:$0xff] %v786
    %1218 = vst [vmem:[#allocation2 + $0x2c8] sm:$0xff] %v788
    %1219 = vst [vmem:[#allocation2 + $0x2d0] sm:$0xff] %v899
    %1220 = vst [vmem:[#allocation2 + $0x2d8] sm:$0xff] %v901
    %1221 = vst [vmem:[#allocation2 + $0x2e0] sm:$0xff] %v1012
    %1222 = vst [vmem:[#allocation2 + $0x2e8] sm:$0xff] %v1014
    %1223 = vst [vmem:[#allocation2 + $0x2f0] sm:$0xff] %v1125
    %1224 = vst [vmem:[#allocation2 + $0x2f8] sm:$0xff] %v1127
    loop: start=0, step=1, limit=8
    $region98: #{emoreact_forward.1} parent=1 // loop_pre_header
      _
    $region99: #{emoreact_forward.1} parent=1 // loop_header
      %s1226 = sphi 0, %s1230
      %p1227 = scmp.ge.s32.totalorder %s1226, 8
      %v1231 = vphi 0.0, %v1482
      %v1232 = vphi 0.0, %v1480
      %v1233 = vphi 0.0, %v1710
      %v1234 = vphi 0.0, %v1708
      %v1235 = vphi 0.0, %v1938
      %v1236 = vphi 0.0, %v1936
    $region100: #{emoreact_forward.1} parent=1 // loop_header_branch
      %1229 = sbr.rel (%p1227) target = $region104
    $region101: #{emoreact_forward.1} parent=1 // loop_body
      %s1237 = smul.u32 %s1226, 8
      %s1238 = sshra.s32 %s1237, 3
      %s1239 = sand.u32 %s1237, 7
      %s1240 = smul.u32 %s1238, 12
      %s1241 = smul.addr %s1240, 8
      %s1242 = scalar_lea.vmem [#allocation2], %s1241
      %v1243 = vld [vmem:[%s1242] sm:$0xff]
      %v1244 = vld [vmem:[%s1242 + $0x8] sm:$0xff]
      %v1245 = vld [vmem:[%s1242 + $0x10] sm:$0xff]
      %v1246 = vld [vmem:[%s1242 + $0x18] sm:$0xff]
      %v1247 = vld [vmem:[%s1242 + $0x20] sm:$0xff]
      %v1248 = vld [vmem:[%s1242 + $0x28] sm:$0xff]
      %v1249 = vld [vmem:[%s1242 + $0x30] sm:$0xff]
      %v1250 = vld [vmem:[%s1242 + $0x38] sm:$0xff]
      %v1251 = vld [vmem:[%s1242 + $0x40] sm:$0xff]
      %v1252 = vld [vmem:[%s1242 + $0x48] sm:$0xff]
      %v1253 = vld [vmem:[%s1242 + $0x50] sm:$0xff]
      %v1254 = vld [vmem:[%s1242 + $0x58] sm:$0xff]
      %v1255 = vld [vmem:[#allocation5] sm:$0xff]
      %v1256 = vld [vmem:[#allocation5 + $0x8] sm:$0xff]
      %v1257 = vld [vmem:[#allocation5 + $0x10] sm:$0xff]
      %v1258 = vld [vmem:[#allocation5 + $0x18] sm:$0xff]
      %v1259 = vld [vmem:[#allocation5 + $0x20] sm:$0xff]
      %v1260 = vld [vmem:[#allocation5 + $0x28] sm:$0xff]
      %v1261 = vld [vmem:[#allocation5 + $0x30] sm:$0xff]
      %v1262 = vld [vmem:[#allocation5 + $0x38] sm:$0xff]
      %v1263 = vld [vmem:[#allocation5 + $0x40] sm:$0xff]
      %v1264 = vld [vmem:[#allocation5 + $0x48] sm:$0xff]
      %v1265 = vld [vmem:[#allocation5 + $0x50] sm:$0xff]
      %v1266 = vld [vmem:[#allocation5 + $0x58] sm:$0xff]
      %v1267 = vld [vmem:[#allocation5 + $0x60] sm:$0xff]
      %v1268 = vld [vmem:[#allocation5 + $0x68] sm:$0xff]
      %v1269 = vld [vmem:[#allocation5 + $0x70] sm:$0xff]
      %v1270 = vld [vmem:[#allocation5 + $0x78] sm:$0xff]
      %v1271 = vld [vmem:[#allocation5 + $0x80] sm:$0xff]
      %v1272 = vld [vmem:[#allocation5 + $0x88] sm:$0xff]
      %v1273 = vld [vmem:[#allocation5 + $0x90] sm:$0xff]
      %v1274 = vld [vmem:[#allocation5 + $0x98] sm:$0xff]
      %v1275 = vld [vmem:[#allocation5 + $0xa0] sm:$0xff]
      %v1276 = vld [vmem:[#allocation5 + $0xa8] sm:$0xff]
      %v1277 = vld [vmem:[#allocation5 + $0xb0] sm:$0xff]
      %v1278 = vld [vmem:[#allocation5 + $0xb8] sm:$0xff]
      %v1279 = vld [vmem:[#allocation5 + $0xc0] sm:$0xff]
      %v1280 = vld [vmem:[#allocation5 + $0xc8] sm:$0xff]
      %v1281 = vld [vmem:[#allocation5 + $0xd0] sm:$0xff]
      %v1282 = vld [vmem:[#allocation5 + $0xd8] sm:$0xff]
      %v1283 = vld [vmem:[#allocation5 + $0xe0] sm:$0xff]
      %v1284 = vld [vmem:[#allocation5 + $0xe8] sm:$0xff]
      %v1285 = vld [vmem:[#allocation5 + $0xf0] sm:$0xff]
      %v1286 = vld [vmem:[#allocation5 + $0xf8] sm:$0xff]
      %v1287 = vld [vmem:[#allocation5 + $0x100] sm:$0xff]
      %v1288 = vld [vmem:[#allocation5 + $0x108] sm:$0xff]
      %v1289 = vld [vmem:[#allocation5 + $0x110] sm:$0xff]
      %v1290 = vld [vmem:[#allocation5 + $0x118] sm:$0xff]
      %v1291 = vld [vmem:[#allocation5 + $0x120] sm:$0xff]
      %v1292 = vld [vmem:[#allocation5 + $0x128] sm:$0xff]
      %v1293 = vld [vmem:[#allocation5 + $0x130] sm:$0xff]
      %v1294 = vld [vmem:[#allocation5 + $0x138] sm:$0xff]
      %v1295 = vld [vmem:[#allocation5 + $0x140] sm:$0xff]
      %v1296 = vld [vmem:[#allocation5 + $0x148] sm:$0xff]
      %v1297 = vld [vmem:[#allocation5 + $0x150] sm:$0xff]
      %v1298 = vld [vmem:[#allocation5 + $0x158] sm:$0xff]
      %v1299 = vld [vmem:[#allocation5 + $0x160] sm:$0xff]
      %v1300 = vld [vmem:[#allocation5 + $0x168] sm:$0xff]
      %v1301 = vld [vmem:[#allocation5 + $0x170] sm:$0xff]
      %v1302 = vld [vmem:[#allocation5 + $0x178] sm:$0xff]
      %v1303 = vld [vmem:[#allocation5 + $0x180] sm:$0xff]
      %v1304 = vld [vmem:[#allocation5 + $0x188] sm:$0xff]
      %v1305 = vld [vmem:[#allocation5 + $0x190] sm:$0xff]
      %v1306 = vld [vmem:[#allocation5 + $0x198] sm:$0xff]
      %v1307 = vld [vmem:[#allocation5 + $0x1a0] sm:$0xff]
      %v1308 = vld [vmem:[#allocation5 + $0x1a8] sm:$0xff]
      %v1309 = vld [vmem:[#allocation5 + $0x1b0] sm:$0xff]
      %v1310 = vld [vmem:[#allocation5 + $0x1b8] sm:$0xff]
      %v1311 = vld [vmem:[#allocation5 + $0x1c0] sm:$0xff]
      %v1312 = vld [vmem:[#allocation5 + $0x1c8] sm:$0xff]
      %v1313 = vld [vmem:[#allocation5 + $0x1d0] sm:$0xff]
      %v1314 = vld [vmem:[#allocation5 + $0x1d8] sm:$0xff]
      %v1315 = vld [vmem:[#allocation5 + $0x1e0] sm:$0xff]
      %v1316 = vld [vmem:[#allocation5 + $0x1e8] sm:$0xff]
      %v1317 = vld [vmem:[#allocation5 + $0x1f0] sm:$0xff]
      %v1318 = vld [vmem:[#allocation5 + $0x1f8] sm:$0xff]
      %1319 = vmatprep.subr.mxu0 %v1316
      %1320 = vmatpush1.msra.mxu0 %v1315
      %1321 = vmatprep.subr.mxu0 %v1312
      %1322 = vmatpush1.msra.mxu0 %v1311
      %1323 = vmatprep.subr.mxu0 %v1308
      %1324 = vmatpush1.msra.mxu0 %v1307
      %1325 = vmatprep.subr.mxu0 %v1304
      %1326 = vmatpush1.msra.mxu0 %v1303
      %1327 = vmatprep.subr.mxu0 %v1300
      %1328 = vmatpush1.msra.mxu0 %v1299
      %1329 = vmatprep.subr.mxu0 %v1296
      %1330 = vmatpush1.msra.mxu0 %v1295
      %1331 = vmatprep.subr.mxu0 %v1292
      %1332 = vmatpush1.msra.mxu0 %v1291
      %1333 = vmatprep.subr.mxu0 %v1288
      %1334 = vmatpush1.msra.mxu0 %v1287
      %1335 = vmatprep.subr.mxu0 %v1284
      %1336 = vmatpush1.msra.mxu0 %v1283
      %1337 = vmatprep.subr.mxu0 %v1280
      %1338 = vmatpush1.msra.mxu0 %v1279
      %1339 = vmatprep.subr.mxu0 %v1276
      %1340 = vmatpush1.msra.mxu0 %v1275
      %1341 = vmatprep.subr.mxu0 %v1272
      %1342 = vmatpush1.msra.mxu0 %v1271
      %1343 = vmatprep.subr.mxu0 %v1268
      %1344 = vmatpush1.msra.mxu0 %v1267
      %1345 = vmatprep.subr.mxu0 %v1264
      %1346 = vmatpush1.msra.mxu0 %v1263
      %1347 = vmatprep.subr.mxu0 %v1260
      %1348 = vmatpush1.msra.mxu0 %v1259
      %1349 = vmatprep.subr.mxu0 %v1256
      %1350 = vmatpush1.msra.mxu0 %v1255
      %1351 = vmatprep.subr.mxu0 0.0
      %1352 = vmatpush2.msra.mxu0 0.0
      %1353 = vmatprep.subr.mxu0 0.0
      %1354 = vmatpush2.msra.mxu0 0.0
      %1355 = vmatprep.subr.mxu0 0.0
      %1356 = vmatpush2.msra.mxu0 0.0
      %1357 = vmatprep.subr.mxu0 0.0
      %1358 = vmatpush2.msra.mxu0 0.0
      %1359 = vmatprep.subr.mxu0 0.0
      %1360 = vmatpush2.msra.mxu0 0.0
      %1361 = vmatprep.subr.mxu0 0.0
      %1362 = vmatpush2.msra.mxu0 0.0
      %1363 = vmatprep.subr.mxu0 0.0
      %1364 = vmatpush2.msra.mxu0 0.0
      %1365 = vmatprep.subr.mxu0 0.0
      %1366 = vmatpush2.msra.mxu0 0.0
      %1367 = vmatprep.subr.mxu0 0.0
      %1368 = vmatpush2.msra.mxu0 0.0
      %1369 = vmatprep.subr.mxu0 0.0
      %1370 = vmatpush2.msra.mxu0 0.0
      %1371 = vmatprep.subr.mxu0 0.0
      %1372 = vmatpush2.msra.mxu0 0.0
      %1373 = vmatprep.subr.mxu0 0.0
      %1374 = vmatpush2.msra.mxu0 0.0
      %1375 = vmatprep.subr.mxu0 0.0
      %1376 = vmatpush2.msra.mxu0 0.0
      %1377 = vmatprep.subr.mxu0 0.0
      %1378 = vmatpush2.msra.mxu0 0.0
      %1379 = vmatprep.subr.mxu0 0.0
      %1380 = vmatpush2.msra.mxu0 0.0
      %1381 = vmatprep.subr.mxu0 0.0
      %1382 = vmatpush2.msra.mxu0 0.0
      %1383 = vmatprep.mubr.f32.mxu0 0.0
      %1384 = vmatmul.mubr.f32.gmra.mxu0 %v1231
      %v1385 = vpop.f32.mrf.mxu0
      %v1386 = vadd.f32 0.0, %v1385
      %v1387 = vpop.f32.mrf.mxu0
      %v1388 = vadd.f32 0.0, %v1387
      %1389 = vdwg.mxu0
      %1390 = vmatprep.subr.mxu0 %v1318
      %1391 = vmatpush1.msra.mxu0 %v1317
      %1392 = vmatprep.subr.mxu0 %v1314
      %1393 = vmatpush1.msra.mxu0 %v1313
      %1394 = vmatprep.subr.mxu0 %v1310
      %1395 = vmatpush1.msra.mxu0 %v1309
      %1396 = vmatprep.subr.mxu0 %v1306
      %1397 = vmatpush1.msra.mxu0 %v1305
      %1398 = vmatprep.subr.mxu0 %v1302
      %1399 = vmatpush1.msra.mxu0 %v1301
      %1400 = vmatprep.subr.mxu0 %v1298
      %1401 = vmatpush1.msra.mxu0 %v1297
      %1402 = vmatprep.subr.mxu0 %v1294
      %1403 = vmatpush1.msra.mxu0 %v1293
      %1404 = vmatprep.subr.mxu0 %v1290
      %1405 = vmatpush1.msra.mxu0 %v1289
      %1406 = vmatprep.subr.mxu0 %v1286
      %1407 = vmatpush1.msra.mxu0 %v1285
      %1408 = vmatprep.subr.mxu0 %v1282
      %1409 = vmatpush1.msra.mxu0 %v1281
      %1410 = vmatprep.subr.mxu0 %v1278
      %1411 = vmatpush1.msra.mxu0 %v1277
      %1412 = vmatprep.subr.mxu0 %v1274
      %1413 = vmatpush1.msra.mxu0 %v1273
      %1414 = vmatprep.subr.mxu0 %v1270
      %1415 = vmatpush1.msra.mxu0 %v1269
      %1416 = vmatprep.subr.mxu0 %v1266
      %1417 = vmatpush1.msra.mxu0 %v1265
      %1418 = vmatprep.subr.mxu0 %v1262
      %1419 = vmatpush1.msra.mxu0 %v1261
      %1420 = vmatprep.subr.mxu0 %v1258
      %1421 = vmatpush1.msra.mxu0 %v1257
      %1422 = vmatprep.subr.mxu0 0.0
      %1423 = vmatpush2.msra.mxu0 0.0
      %1424 = vmatprep.subr.mxu0 0.0
      %1425 = vmatpush2.msra.mxu0 0.0
      %1426 = vmatprep.subr.mxu0 0.0
      %1427 = vmatpush2.msra.mxu0 0.0
      %1428 = vmatprep.subr.mxu0 0.0
      %1429 = vmatpush2.msra.mxu0 0.0
      %1430 = vmatprep.subr.mxu0 0.0
      %1431 = vmatpush2.msra.mxu0 0.0
      %1432 = vmatprep.subr.mxu0 0.0
      %1433 = vmatpush2.msra.mxu0 0.0
      %1434 = vmatprep.subr.mxu0 0.0
      %1435 = vmatpush2.msra.mxu0 0.0
      %1436 = vmatprep.subr.mxu0 0.0
      %1437 = vmatpush2.msra.mxu0 0.0
      %1438 = vmatprep.subr.mxu0 0.0
      %1439 = vmatpush2.msra.mxu0 0.0
      %1440 = vmatprep.subr.mxu0 0.0
      %1441 = vmatpush2.msra.mxu0 0.0
      %1442 = vmatprep.subr.mxu0 0.0
      %1443 = vmatpush2.msra.mxu0 0.0
      %1444 = vmatprep.subr.mxu0 0.0
      %1445 = vmatpush2.msra.mxu0 0.0
      %1446 = vmatprep.subr.mxu0 0.0
      %1447 = vmatpush2.msra.mxu0 0.0
      %1448 = vmatprep.subr.mxu0 0.0
      %1449 = vmatpush2.msra.mxu0 0.0
      %1450 = vmatprep.subr.mxu0 0.0
      %1451 = vmatpush2.msra.mxu0 0.0
      %1452 = vmatprep.subr.mxu0 0.0
      %1453 = vmatpush2.msra.mxu0 0.0
      %1454 = vmatprep.mubr.f32.mxu0 0.0
      %1455 = vmatmul.mubr.f32.gmra.mxu0 %v1231
      %v1456 = vpop.f32.mrf.mxu0
      %v1457 = vadd.f32 0.0, %v1456
      %v1458 = vpop.f32.mrf.mxu0
      %v1459 = vadd.f32 0.0, %v1458
      %1460 = vdwg.mxu0
      %v1461 = vadd.f32 %v1243, %v1386
      %v1462 = vadd.f32 %v1244, %v1388
      %v1463 = vadd.f32 %v1245, %v1457
      %v1464 = vadd.f32 %v1246, %v1459
      %v1465 = vmul.f32 %v1461, 0.5
      %v1466 = vmul.f32 %v1462, 0.5
      %v1467 = vmul.f32 %v1463, 0.5
      %v1468 = vtanh.pop %v1465
      %v1469 = vtanh.pop %v1466
      %v1470 = vtanh.pop %v1467
      %v1471 = vmul.f32 %v1468, 0.5
      %v1472 = vmul.f32 %v1469, 0.5
      %v1473 = vmul.f32 %v1470, 0.5
      %v1474 = vadd.f32 %v1471, 0.5
      %v1475 = vadd.f32 %v1472, 0.5
      %v1476 = vadd.f32 %v1473, 0.5
      %v1477 = vtanh.pop %v1464
      %v1478 = vmul.f32 %v1475, %v1232
      %v1479 = vmul.f32 %v1474, %v1477
      %v1480 = vadd.f32 %v1478, %v1479
      %v1481 = vtanh.pop %v1480
      %v1482 = vmul.f32 %v1476, %v1481
      %v1483 = vld [vmem:[#allocation7] sm:$0xff]
      %v1484 = vld [vmem:[#allocation7 + $0x8] sm:$0xff]
      %v1485 = vld [vmem:[#allocation7 + $0x10] sm:$0xff]
      %v1486 = vld [vmem:[#allocation7 + $0x18] sm:$0xff]
      %v1487 = vld [vmem:[#allocation7 + $0x20] sm:$0xff]
      %v1488 = vld [vmem:[#allocation7 + $0x28] sm:$0xff]
      %v1489 = vld [vmem:[#allocation7 + $0x30] sm:$0xff]
      %v1490 = vld [vmem:[#allocation7 + $0x38] sm:$0xff]
      %v1491 = vld [vmem:[#allocation7 + $0x40] sm:$0xff]
      %v1492 = vld [vmem:[#allocation7 + $0x48] sm:$0xff]
      %v1493 = vld [vmem:[#allocation7 + $0x50] sm:$0xff]
      %v1494 = vld [vmem:[#allocation7 + $0x58] sm:$0xff]
      %v1495 = vld [vmem:[#allocation7 + $0x60] sm:$0xff]
      %v1496 = vld [vmem:[#allocation7 + $0x68] sm:$0xff]
      %v1497 = vld [vmem:[#allocation7 + $0x70] sm:$0xff]
      %v1498 = vld [vmem:[#allocation7 + $0x78] sm:$0xff]
      %v1499 = vld [vmem:[#allocation7 + $0x80] sm:$0xff]
      %v1500 = vld [vmem:[#allocation7 + $0x88] sm:$0xff]
      %v1501 = vld [vmem:[#allocation7 + $0x90] sm:$0xff]
      %v1502 = vld [vmem:[#allocation7 + $0x98] sm:$0xff]
      %v1503 = vld [vmem:[#allocation7 + $0xa0] sm:$0xff]
      %v1504 = vld [vmem:[#allocation7 + $0xa8] sm:$0xff]
      %v1505 = vld [vmem:[#allocation7 + $0xb0] sm:$0xff]
      %v1506 = vld [vmem:[#allocation7 + $0xb8] sm:$0xff]
      %v1507 = vld [vmem:[#allocation7 + $0xc0] sm:$0xff]
      %v1508 = vld [vmem:[#allocation7 + $0xc8] sm:$0xff]
      %v1509 = vld [vmem:[#allocation7 + $0xd0] sm:$0xff]
      %v1510 = vld [vmem:[#allocation7 + $0xd8] sm:$0xff]
      %v1511 = vld [vmem:[#allocation7 + $0xe0] sm:$0xff]
      %v1512 = vld [vmem:[#allocation7 + $0xe8] sm:$0xff]
      %v1513 = vld [vmem:[#allocation7 + $0xf0] sm:$0xff]
      %v1514 = vld [vmem:[#allocation7 + $0xf8] sm:$0xff]
      %v1515 = vld [vmem:[#allocation7 + $0x100] sm:$0xff]
      %v1516 = vld [vmem:[#allocation7 + $0x108] sm:$0xff]
      %v1517 = vld [vmem:[#allocation7 + $0x110] sm:$0xff]
      %v1518 = vld [vmem:[#allocation7 + $0x118] sm:$0xff]
      %v1519 = vld [vmem:[#allocation7 + $0x120] sm:$0xff]
      %v1520 = vld [vmem:[#allocation7 + $0x128] sm:$0xff]
      %v1521 = vld [vmem:[#allocation7 + $0x130] sm:$0xff]
      %v1522 = vld [vmem:[#allocation7 + $0x138] sm:$0xff]
      %v1523 = vld [vmem:[#allocation7 + $0x140] sm:$0xff]
      %v1524 = vld [vmem:[#allocation7 + $0x148] sm:$0xff]
      %v1525 = vld [vmem:[#allocation7 + $0x150] sm:$0xff]
      %v1526 = vld [vmem:[#allocation7 + $0x158] sm:$0xff]
      %v1527 = vld [vmem:[#allocation7 + $0x160] sm:$0xff]
      %v1528 = vld [vmem:[#allocation7 + $0x168] sm:$0xff]
      %v1529 = vld [vmem:[#allocation7 + $0x170] sm:$0xff]
      %v1530 = vld [vmem:[#allocation7 + $0x178] sm:$0xff]
      %v1531 = vld [vmem:[#allocation7 + $0x180] sm:$0xff]
      %v1532 = vld [vmem:[#allocation7 + $0x188] sm:$0xff]
      %v1533 = vld [vmem:[#allocation7 + $0x190] sm:$0xff]
      %v1534 = vld [vmem:[#allocation7 + $0x198] sm:$0xff]
      %v1535 = vld [vmem:[#allocation7 + $0x1a0] sm:$0xff]
      %v1536 = vld [vmem:[#allocation7 + $0x1a8] sm:$0xff]
      %v1537 = vld [vmem:[#allocation7 + $0x1b0] sm:$0xff]
      %v1538 = vld [vmem:[#allocation7 + $0x1b8] sm:$0xff]
      %v1539 = vld [vmem:[#allocation7 + $0x1c0] sm:$0xff]
      %v1540 = vld [vmem:[#allocation7 + $0x1c8] sm:$0xff]
      %v1541 = vld [vmem:[#allocation7 + $0x1d0] sm:$0xff]
      %v1542 = vld [vmem:[#allocation7 + $0x1d8] sm:$0xff]
      %v1543 = vld [vmem:[#allocation7 + $0x1e0] sm:$0xff]
      %v1544 = vld [vmem:[#allocation7 + $0x1e8] sm:$0xff]
      %v1545 = vld [vmem:[#allocation7 + $0x1f0] sm:$0xff]
      %v1546 = vld [vmem:[#allocation7 + $0x1f8] sm:$0xff]
      %1547 = vmatprep.subr.mxu0 %v1544
      %1548 = vmatpush1.msra.mxu0 %v1543
      %1549 = vmatprep.subr.mxu0 %v1540
      %1550 = vmatpush1.msra.mxu0 %v1539
      %1551 = vmatprep.subr.mxu0 %v1536
      %1552 = vmatpush1.msra.mxu0 %v1535
      %1553 = vmatprep.subr.mxu0 %v1532
      %1554 = vmatpush1.msra.mxu0 %v1531
      %1555 = vmatprep.subr.mxu0 %v1528
      %1556 = vmatpush1.msra.mxu0 %v1527
      %1557 = vmatprep.subr.mxu0 %v1524
      %1558 = vmatpush1.msra.mxu0 %v1523
      %1559 = vmatprep.subr.mxu0 %v1520
      %1560 = vmatpush1.msra.mxu0 %v1519
      %1561 = vmatprep.subr.mxu0 %v1516
      %1562 = vmatpush1.msra.mxu0 %v1515
      %1563 = vmatprep.subr.mxu0 %v1512
      %1564 = vmatpush1.msra.mxu0 %v1511
      %1565 = vmatprep.subr.mxu0 %v1508
      %1566 = vmatpush1.msra.mxu0 %v1507
      %1567 = vmatprep.subr.mxu0 %v1504
      %1568 = vmatpush1.msra.mxu0 %v1503
      %1569 = vmatprep.subr.mxu0 %v1500
      %1570 = vmatpush1.msra.mxu0 %v1499
      %1571 = vmatprep.subr.mxu0 %v1496
      %1572 = vmatpush1.msra.mxu0 %v1495
      %1573 = vmatprep.subr.mxu0 %v1492
      %1574 = vmatpush1.msra.mxu0 %v1491
      %1575 = vmatprep.subr.mxu0 %v1488
      %1576 = vmatpush1.msra.mxu0 %v1487
      %1577 = vmatprep.subr.mxu0 %v1484
      %1578 = vmatpush1.msra.mxu0 %v1483
      %1579 = vmatprep.subr.mxu0 0.0
      %1580 = vmatpush2.msra.mxu0 0.0
      %1581 = vmatprep.subr.mxu0 0.0
      %1582 = vmatpush2.msra.mxu0 0.0
      %1583 = vmatprep.subr.mxu0 0.0
      %1584 = vmatpush2.msra.mxu0 0.0
      %1585 = vmatprep.subr.mxu0 0.0
      %1586 = vmatpush2.msra.mxu0 0.0
      %1587 = vmatprep.subr.mxu0 0.0
      %1588 = vmatpush2.msra.mxu0 0.0
      %1589 = vmatprep.subr.mxu0 0.0
      %1590 = vmatpush2.msra.mxu0 0.0
      %1591 = vmatprep.subr.mxu0 0.0
      %1592 = vmatpush2.msra.mxu0 0.0
      %1593 = vmatprep.subr.mxu0 0.0
      %1594 = vmatpush2.msra.mxu0 0.0
      %1595 = vmatprep.subr.mxu0 0.0
      %1596 = vmatpush2.msra.mxu0 0.0
      %1597 = vmatprep.subr.mxu0 0.0
      %1598 = vmatpush2.msra.mxu0 0.0
      %1599 = vmatprep.subr.mxu0 0.0
      %1600 = vmatpush2.msra.mxu0 0.0
      %1601 = vmatprep.subr.mxu0 0.0
      %1602 = vmatpush2.msra.mxu0 0.0
      %1603 = vmatprep.subr.mxu0 0.0
      %1604 = vmatpush2.msra.mxu0 0.0
      %1605 = vmatprep.subr.mxu0 0.0
      %1606 = vmatpush2.msra.mxu0 0.0
      %1607 = vmatprep.subr.mxu0 0.0
      %1608 = vmatpush2.msra.mxu0 0.0
      %1609 = vmatprep.subr.mxu0 0.0
      %1610 = vmatpush2.msra.mxu0 0.0
      %1611 = vmatprep.mubr.f32.mxu0 0.0
      %1612 = vmatmul.mubr.f32.gmra.mxu0 %v1233
      %v1613 = vpop.f32.mrf.mxu0
      %v1614 = vadd.f32 0.0, %v1613
      %v1615 = vpop.f32.mrf.mxu0
      %v1616 = vadd.f32 0.0, %v1615
      %1617 = vdwg.mxu0
      %1618 = vmatprep.subr.mxu0 %v1546
      %1619 = vmatpush1.msra.mxu0 %v1545
      %1620 = vmatprep.subr.mxu0 %v1542
      %1621 = vmatpush1.msra.mxu0 %v1541
      %1622 = vmatprep.subr.mxu0 %v1538
      %1623 = vmatpush1.msra.mxu0 %v1537
      %1624 = vmatprep.subr.mxu0 %v1534
      %1625 = vmatpush1.msra.mxu0 %v1533
      %1626 = vmatprep.subr.mxu0 %v1530
      %1627 = vmatpush1.msra.mxu0 %v1529
      %1628 = vmatprep.subr.mxu0 %v1526
      %1629 = vmatpush1.msra.mxu0 %v1525
      %1630 = vmatprep.subr.mxu0 %v1522
      %1631 = vmatpush1.msra.mxu0 %v1521
      %1632 = vmatprep.subr.mxu0 %v1518
      %1633 = vmatpush1.msra.mxu0 %v1517
      %1634 = vmatprep.subr.mxu0 %v1514
      %1635 = vmatpush1.msra.mxu0 %v1513
      %1636 = vmatprep.subr.mxu0 %v1510
      %1637 = vmatpush1.msra.mxu0 %v1509
      %1638 = vmatprep.subr.mxu0 %v1506
      %1639 = vmatpush1.msra.mxu0 %v1505
      %1640 = vmatprep.subr.mxu0 %v1502
      %1641 = vmatpush1.msra.mxu0 %v1501
      %1642 = vmatprep.subr.mxu0 %v1498
      %1643 = vmatpush1.msra.mxu0 %v1497
      %1644 = vmatprep.subr.mxu0 %v1494
      %1645 = vmatpush1.msra.mxu0 %v1493
      %1646 = vmatprep.subr.mxu0 %v1490
      %1647 = vmatpush1.msra.mxu0 %v1489
      %1648 = vmatprep.subr.mxu0 %v1486
      %1649 = vmatpush1.msra.mxu0 %v1485
      %1650 = vmatprep.subr.mxu0 0.0
      %1651 = vmatpush2.msra.mxu0 0.0
      %1652 = vmatprep.subr.mxu0 0.0
      %1653 = vmatpush2.msra.mxu0 0.0
      %1654 = vmatprep.subr.mxu0 0.0
      %1655 = vmatpush2.msra.mxu0 0.0
      %1656 = vmatprep.subr.mxu0 0.0
      %1657 = vmatpush2.msra.mxu0 0.0
      %1658 = vmatprep.subr.mxu0 0.0
      %1659 = vmatpush2.msra.mxu0 0.0
      %1660 = vmatprep.subr.mxu0 0.0
      %1661 = vmatpush2.msra.mxu0 0.0
      %1662 = vmatprep.subr.mxu0 0.0
      %1663 = vmatpush2.msra.mxu0 0.0
      %1664 = vmatprep.subr.mxu0 0.0
      %1665 = vmatpush2.msra.mxu0 0.0
      %1666 = vmatprep.subr.mxu0 0.0
      %1667 = vmatpush2.msra.mxu0 0.0
      %1668 = vmatprep.subr.mxu0 0.0
      %1669 = vmatpush2.msra.mxu0 0.0
      %1670 = vmatprep.subr.mxu0 0.0
      %1671 = vmatpush2.msra.mxu0 0.0
      %1672 = vmatprep.subr.mxu0 0.0
      %1673 = vmatpush2.msra.mxu0 0.0
      %1674 = vmatprep.subr.mxu0 0.0
      %1675 = vmatpush2.msra.mxu0 0.0
      %1676 = vmatprep.subr.mxu0 0.0
      %1677 = vmatpush2.msra.mxu0 0.0
      %1678 = vmatprep.subr.mxu0 0.0
      %1679 = vmatpush2.msra.mxu0 0.0
      %1680 = vmatprep.subr.mxu0 0.0
      %1681 = vmatpush2.msra.mxu0 0.0
      %1682 = vmatprep.mubr.f32.mxu0 0.0
      %1683 = vmatmul.mubr.f32.gmra.mxu0 %v1233
      %v1684 = vpop.f32.mrf.mxu0
      %v1685 = vadd.f32 0.0, %v1684
      %v1686 = vpop.f32.mrf.mxu0
      %v1687 = vadd.f32 0.0, %v1686
      %1688 = vdwg.mxu0
      %v1689 = vadd.f32 %v1247, %v1614
      %v1690 = vadd.f32 %v1248, %v1616
      %v1691 = vadd.f32 %v1249, %v1685
      %v1692 = vadd.f32 %v1250, %v1687
      %v1693 = vmul.f32 %v1689, 0.5
      %v1694 = vmul.f32 %v1690, 0.5
      %v1695 = vmul.f32 %v1691, 0.5
      %v1696 = vtanh.pop %v1693
      %v1697 = vtanh.pop %v1694
      %v1698 = vtanh.pop %v1695
      %v1699 = vmul.f32 %v1696, 0.5
      %v1700 = vmul.f32 %v1697, 0.5
      %v1701 = vmul.f32 %v1698, 0.5
      %v1702 = vadd.f32 %v1699, 0.5
      %v1703 = vadd.f32 %v1700, 0.5
      %v1704 = vadd.f32 %v1701, 0.5
      %v1705 = vtanh.pop %v1692
      %v1706 = vmul.f32 %v1703, %v1234
      %v1707 = vmul.f32 %v1702, %v1705
      %v1708 = vadd.f32 %v1706, %v1707
      %v1709 = vtanh.pop %v1708
      %v1710 = vmul.f32 %v1704, %v1709
      %v1711 = vld [vmem:[#allocation8] sm:$0xff]
      %v1712 = vld [vmem:[#allocation8 + $0x8] sm:$0xff]
      %v1713 = vld [vmem:[#allocation8 + $0x10] sm:$0xff]
      %v1714 = vld [vmem:[#allocation8 + $0x18] sm:$0xff]
      %v1715 = vld [vmem:[#allocation8 + $0x20] sm:$0xff]
      %v1716 = vld [vmem:[#allocation8 + $0x28] sm:$0xff]
      %v1717 = vld [vmem:[#allocation8 + $0x30] sm:$0xff]
      %v1718 = vld [vmem:[#allocation8 + $0x38] sm:$0xff]
      %v1719 = vld [vmem:[#allocation8 + $0x40] sm:$0xff]
      %v1720 = vld [vmem:[#allocation8 + $0x48] sm:$0xff]
      %v1721 = vld [vmem:[#allocation8 + $0x50] sm:$0xff]
      %v1722 = vld [vmem:[#allocation8 + $0x58] sm:$0xff]
      %v1723 = vld [vmem:[#allocation8 + $0x60] sm:$0xff]
      %v1724 = vld [vmem:[#allocation8 + $0x68] sm:$0xff]
      %v1725 = vld [vmem:[#allocation8 + $0x70] sm:$0xff]
      %v1726 = vld [vmem:[#allocation8 + $0x78] sm:$0xff]
      %v1727 = vld [vmem:[#allocation8 + $0x80] sm:$0xff]
      %v1728 = vld [vmem:[#allocation8 + $0x88] sm:$0xff]
      %v1729 = vld [vmem:[#allocation8 + $0x90] sm:$0xff]
      %v1730 = vld [vmem:[#allocation8 + $0x98] sm:$0xff]
      %v1731 = vld [vmem:[#allocation8 + $0xa0] sm:$0xff]
      %v1732 = vld [vmem:[#allocation8 + $0xa8] sm:$0xff]
      %v1733 = vld [vmem:[#allocation8 + $0xb0] sm:$0xff]
      %v1734 = vld [vmem:[#allocation8 + $0xb8] sm:$0xff]
      %v1735 = vld [vmem:[#allocation8 + $0xc0] sm:$0xff]
      %v1736 = vld [vmem:[#allocation8 + $0xc8] sm:$0xff]
      %v1737 = vld [vmem:[#allocation8 + $0xd0] sm:$0xff]
      %v1738 = vld [vmem:[#allocation8 + $0xd8] sm:$0xff]
      %v1739 = vld [vmem:[#allocation8 + $0xe0] sm:$0xff]
      %v1740 = vld [vmem:[#allocation8 + $0xe8] sm:$0xff]
      %v1741 = vld [vmem:[#allocation8 + $0xf0] sm:$0xff]
      %v1742 = vld [vmem:[#allocation8 + $0xf8] sm:$0xff]
      %v1743 = vld [vmem:[#allocation8 + $0x100] sm:$0xff]
      %v1744 = vld [vmem:[#allocation8 + $0x108] sm:$0xff]
      %v1745 = vld [vmem:[#allocation8 + $0x110] sm:$0xff]
      %v1746 = vld [vmem:[#allocation8 + $0x118] sm:$0xff]
      %v1747 = vld [vmem:[#allocation8 + $0x120] sm:$0xff]
      %v1748 = vld [vmem:[#allocation8 + $0x128] sm:$0xff]
      %v1749 = vld [vmem:[#allocation8 + $0x130] sm:$0xff]
      %v1750 = vld [vmem:[#allocation8 + $0x138] sm:$0xff]
      %v1751 = vld [vmem:[#allocation8 + $0x140] sm:$0xff]
      %v1752 = vld [vmem:[#allocation8 + $0x148] sm:$0xff]
      %v1753 = vld [vmem:[#allocation8 + $0x150] sm:$0xff]
      %v1754 = vld [vmem:[#allocation8 + $0x158] sm:$0xff]
      %v1755 = vld [vmem:[#allocation8 + $0x160] sm:$0xff]
      %v1756 = vld [vmem:[#allocation8 + $0x168] sm:$0xff]
      %v1757 = vld [vmem:[#allocation8 + $0x170] sm:$0xff]
      %v1758 = vld [vmem:[#allocation8 + $0x178] sm:$0xff]
      %v1759 = vld [vmem:[#allocation8 + $0x180] sm:$0xff]
      %v1760 = vld [vmem:[#allocation8 + $0x188] sm:$0xff]
      %v1761 = vld [vmem:[#allocation8 + $0x190] sm:$0xff]
      %v1762 = vld [vmem:[#allocation8 + $0x198] sm:$0xff]
      %v1763 = vld [vmem:[#allocation8 + $0x1a0] sm:$0xff]
      %v1764 = vld [vmem:[#allocation8 + $0x1a8] sm:$0xff]
      %v1765 = vld [vmem:[#allocation8 + $0x1b0] sm:$0xff]
      %v1766 = vld [vmem:[#allocation8 + $0x1b8] sm:$0xff]
      %v1767 = vld [vmem:[#allocation8 + $0x1c0] sm:$0xff]
      %v1768 = vld [vmem:[#allocation8 + $0x1c8] sm:$0xff]
      %v1769 = vld [vmem:[#allocation8 + $0x1d0] sm:$0xff]
      %v1770 = vld [vmem:[#allocation8 + $0x1d8] sm:$0xff]
      %v1771 = vld [vmem:[#allocation8 + $0x1e0] sm:$0xff]
      %v1772 = vld [vmem:[#allocation8 + $0x1e8] sm:$0xff]
      %v1773 = vld [vmem:[#allocation8 + $0x1f0] sm:$0xff]
      %v1774 = vld [vmem:[#allocation8 + $0x1f8] sm:$0xff]
      %1775 = vmatprep.subr.mxu0 %v1772
      %1776 = vmatpush1.msra.mxu0 %v1771
      %1777 = vmatprep.subr.mxu0 %v1768
      %1778 = vmatpush1.msra.mxu0 %v1767
      %1779 = vmatprep.subr.mxu0 %v1764
      %1780 = vmatpush1.msra.mxu0 %v1763
      %1781 = vmatprep.subr.mxu0 %v1760
      %1782 = vmatpush1.msra.mxu0 %v1759
      %1783 = vmatprep.subr.mxu0 %v1756
      %1784 = vmatpush1.msra.mxu0 %v1755
      %1785 = vmatprep.subr.mxu0 %v1752
      %1786 = vmatpush1.msra.mxu0 %v1751
      %1787 = vmatprep.subr.mxu0 %v1748
      %1788 = vmatpush1.msra.mxu0 %v1747
      %1789 = vmatprep.subr.mxu0 %v1744
      %1790 = vmatpush1.msra.mxu0 %v1743
      %1791 = vmatprep.subr.mxu0 %v1740
      %1792 = vmatpush1.msra.mxu0 %v1739
      %1793 = vmatprep.subr.mxu0 %v1736
      %1794 = vmatpush1.msra.mxu0 %v1735
      %1795 = vmatprep.subr.mxu0 %v1732
      %1796 = vmatpush1.msra.mxu0 %v1731
      %1797 = vmatprep.subr.mxu0 %v1728
      %1798 = vmatpush1.msra.mxu0 %v1727
      %1799 = vmatprep.subr.mxu0 %v1724
      %1800 = vmatpush1.msra.mxu0 %v1723
      %1801 = vmatprep.subr.mxu0 %v1720
      %1802 = vmatpush1.msra.mxu0 %v1719
      %1803 = vmatprep.subr.mxu0 %v1716
      %1804 = vmatpush1.msra.mxu0 %v1715
      %1805 = vmatprep.subr.mxu0 %v1712
      %1806 = vmatpush1.msra.mxu0 %v1711
      %1807 = vmatprep.subr.mxu0 0.0
      %1808 = vmatpush2.msra.mxu0 0.0
      %1809 = vmatprep.subr.mxu0 0.0
      %1810 = vmatpush2.msra.mxu0 0.0
      %1811 = vmatprep.subr.mxu0 0.0
      %1812 = vmatpush2.msra.mxu0 0.0
      %1813 = vmatprep.subr.mxu0 0.0
      %1814 = vmatpush2.msra.mxu0 0.0
      %1815 = vmatprep.subr.mxu0 0.0
      %1816 = vmatpush2.msra.mxu0 0.0
      %1817 = vmatprep.subr.mxu0 0.0
      %1818 = vmatpush2.msra.mxu0 0.0
      %1819 = vmatprep.subr.mxu0 0.0
      %1820 = vmatpush2.msra.mxu0 0.0
      %1821 = vmatprep.subr.mxu0 0.0
      %1822 = vmatpush2.msra.mxu0 0.0
      %1823 = vmatprep.subr.mxu0 0.0
      %1824 = vmatpush2.msra.mxu0 0.0
      %1825 = vmatprep.subr.mxu0 0.0
      %1826 = vmatpush2.msra.mxu0 0.0
      %1827 = vmatprep.subr.mxu0 0.0
      %1828 = vmatpush2.msra.mxu0 0.0
      %1829 = vmatprep.subr.mxu0 0.0
      %1830 = vmatpush2.msra.mxu0 0.0
      %1831 = vmatprep.subr.mxu0 0.0
      %1832 = vmatpush2.msra.mxu0 0.0
      %1833 = vmatprep.subr.mxu0 0.0
      %1834 = vmatpush2.msra.mxu0 0.0
      %1835 = vmatprep.subr.mxu0 0.0
      %1836 = vmatpush2.msra.mxu0 0.0
      %1837 = vmatprep.subr.mxu0 0.0
      %1838 = vmatpush2.msra.mxu0 0.0
      %1839 = vmatprep.mubr.f32.mxu0 0.0
      %1840 = vmatmul.mubr.f32.gmra.mxu0 %v1235
      %v1841 = vpop.f32.mrf.mxu0
      %v1842 = vadd.f32 0.0, %v1841
      %v1843 = vpop.f32.mrf.mxu0
      %v1844 = vadd.f32 0.0, %v1843
      %1845 = vdwg.mxu0
      %1846 = vmatprep.subr.mxu0 %v1774
      %1847 = vmatpush1.msra.mxu0 %v1773
      %1848 = vmatprep.subr.mxu0 %v1770
      %1849 = vmatpush1.msra.mxu0 %v1769
      %1850 = vmatprep.subr.mxu0 %v1766
      %1851 = vmatpush1.msra.mxu0 %v1765
      %1852 = vmatprep.subr.mxu0 %v1762
      %1853 = vmatpush1.msra.mxu0 %v1761
      %1854 = vmatprep.subr.mxu0 %v1758
      %1855 = vmatpush1.msra.mxu0 %v1757
      %1856 = vmatprep.subr.mxu0 %v1754
      %1857 = vmatpush1.msra.mxu0 %v1753
      %1858 = vmatprep.subr.mxu0 %v1750
      %1859 = vmatpush1.msra.mxu0 %v1749
      %1860 = vmatprep.subr.mxu0 %v1746
      %1861 = vmatpush1.msra.mxu0 %v1745
      %1862 = vmatprep.subr.mxu0 %v1742
      %1863 = vmatpush1.msra.mxu0 %v1741
      %1864 = vmatprep.subr.mxu0 %v1738
      %1865 = vmatpush1.msra.mxu0 %v1737
      %1866 = vmatprep.subr.mxu0 %v1734
      %1867 = vmatpush1.msra.mxu0 %v1733
      %1868 = vmatprep.subr.mxu0 %v1730
      %1869 = vmatpush1.msra.mxu0 %v1729
      %1870 = vmatprep.subr.mxu0 %v1726
      %1871 = vmatpush1.msra.mxu0 %v1725
      %1872 = vmatprep.subr.mxu0 %v1722
      %1873 = vmatpush1.msra.mxu0 %v1721
      %1874 = vmatprep.subr.mxu0 %v1718
      %1875 = vmatpush1.msra.mxu0 %v1717
      %1876 = vmatprep.subr.mxu0 %v1714
      %1877 = vmatpush1.msra.mxu0 %v1713
      %1878 = vmatprep.subr.mxu0 0.0
      %1879 = vmatpush2.msra.mxu0 0.0
      %1880 = vmatprep.subr.mxu0 0.0
      %1881 = vmatpush2.msra.mxu0 0.0
      %1882 = vmatprep.subr.mxu0 0.0
      %1883 = vmatpush2.msra.mxu0 0.0
      %1884 = vmatprep.subr.mxu0 0.0
      %1885 = vmatpush2.msra.mxu0 0.0
      %1886 = vmatprep.subr.mxu0 0.0
      %1887 = vmatpush2.msra.mxu0 0.0
      %1888 = vmatprep.subr.mxu0 0.0
      %1889 = vmatpush2.msra.mxu0 0.0
      %1890 = vmatprep.subr.mxu0 0.0
      %1891 = vmatpush2.msra.mxu0 0.0
      %1892 = vmatprep.subr.mxu0 0.0
      %1893 = vmatpush2.msra.mxu0 0.0
      %1894 = vmatprep.subr.mxu0 0.0
      %1895 = vmatpush2.msra.mxu0 0.0
      %1896 = vmatprep.subr.mxu0 0.0
      %1897 = vmatpush2.msra.mxu0 0.0
      %1898 = vmatprep.subr.mxu0 0.0
      %1899 = vmatpush2.msra.mxu0 0.0
      %1900 = vmatprep.subr.mxu0 0.0
      %1901 = vmatpush2.msra.mxu0 0.0
      %1902 = vmatprep.subr.mxu0 0.0
      %1903 = vmatpush2.msra.mxu0 0.0
      %1904 = vmatprep.subr.mxu0 0.0
      %1905 = vmatpush2.msra.mxu0 0.0
      %1906 = vmatprep.subr.mxu0 0.0
      %1907 = vmatpush2.msra.mxu0 0.0
      %1908 = vmatprep.subr.mxu0 0.0
      %1909 = vmatpush2.msra.mxu0 0.0
      %1910 = vmatprep.mubr.f32.mxu0 0.0
      %1911 = vmatmul.mubr.f32.gmra.mxu0 %v1235
      %v1912 = vpop.f32.mrf.mxu0
      %v1913 = vadd.f32 0.0, %v1912
      %v1914 = vpop.f32.mrf.mxu0
      %v1915 = vadd.f32 0.0, %v1914
      %1916 = vdwg.mxu0
      %v1917 = vadd.f32 %v1251, %v1842
      %v1918 = vadd.f32 %v1252, %v1844
      %v1919 = vadd.f32 %v1253, %v1913
      %v1920 = vadd.f32 %v1254, %v1915
      %v1921 = vmul.f32 %v1917, 0.5
      %v1922 = vmul.f32 %v1918, 0.5
      %v1923 = vmul.f32 %v1919, 0.5
      %v1924 = vtanh.pop %v1921
      %v1925 = vtanh.pop %v1922
      %v1926 = vtanh.pop %v1923
      %v1927 = vmul.f32 %v1924, 0.5
      %v1928 = vmul.f32 %v1925, 0.5
      %v1929 = vmul.f32 %v1926, 0.5
      %v1930 = vadd.f32 %v1927, 0.5
      %v1931 = vadd.f32 %v1928, 0.5
      %v1932 = vadd.f32 %v1929, 0.5
      %v1933 = vtanh.pop %v1920
      %v1934 = vmul.f32 %v1931, %v1236
      %v1935 = vmul.f32 %v1930, %v1933
      %v1936 = vadd.f32 %v1934, %v1935
      %v1937 = vtanh.pop %v1936
      %v1938 = vmul.f32 %v1932, %v1937
    $region102: #{emoreact_forward.1} parent=1 // loop_footer
      %s1230 = sadd.s32 1, %s1226
    $region103: #{emoreact_forward.1} parent=1 // loop_footer_branch
      %1225 = sbr.rel target = $region99
    $region104: #{emoreact_forward.1} parent=1 // loop_exit
      _
    %v1939 = vld [vmem:[#allocation11] sm:$0x1]
    %v1940 = vld [vmem:[#allocation13] sm:$0x1]
    %1941 = vadd.xlane.f32.xlu0 %v1231
    %v1942 = vpop.xlane.xlu0 %1941
    %v1943 = vrcp.pop 128.0
    %v1944 = vmul.f32 %v1942, %v1943
    %v1945 = vsub.f32 %v1231, %v1944
    %v1946 = vmul.f32 %v1945, %v1945
    %1947 = vadd.xlane.f32.xlu0 %v1946
    %v1948 = vpop.xlane.xlu0 %1947
    %v1949 = vmul.f32 %v1948, %v1943
    %v1950 = vadd.f32 %v1949, 1e-05
    %v1951 = vrsqrt.pop %v1950
    %v1952 = vmul.f32 %v1945, %v1951
    %v1954 = vlaneseq
    %v1955 = vshrl.u32 %v1954, 7
    %v1956 = vsub.s32 0, %v1955
    %v1957 = vrot.slane %v1939, %v1956
    %v1959 = vmul.f32 %v1952, %v1957
    %v1961 = vlaneseq
    %v1962 = vshrl.u32 %v1961, 7
    %v1963 = vsub.s32 0, %v1962
    %v1964 = vrot.slane %v1940, %v1963
    %v1966 = vadd.f32 %v1959, %v1964
    %s1967 = scalar_lea.vmem [#allocation11], 1
    %v1968 = vld [vmem:[%s1967] sm:$0x1]
    %s1969 = scalar_lea.vmem [#allocation13], 1
    %v1970 = vld [vmem:[%s1969] sm:$0x1]
    %1971 = vadd.xlane.f32.xlu0 %v1233
    %v1972 = vpop.xlane.xlu0 %1971
    %v1973 = vmul.f32 %v1972, %v1943
    %v1974 = vsub.f32 %v1233, %v1973
    %v1975 = vmul.f32 %v1974, %v1974
    %1976 = vadd.xlane.f32.xlu0 %v1975
    %v1977 = vpop.xlane.xlu0 %1976
    %v1978 = vmul.f32 %v1977, %v1943
    %v1979 = vadd.f32 %v1978, 1e-05
    %v1980 = vrsqrt.pop %v1979
    %v1981 = vmul.f32 %v1974, %v1980
    %v1983 = vlaneseq
    %v1984 = vshrl.u32 %v1983, 7
    %v1985 = vsub.s32 0, %v1984
    %v1986 = vrot.slane %v1968, %v1985
    %v1988 = vmul.f32 %v1981, %v1986
    %v1990 = vlaneseq
    %v1991 = vshrl.u32 %v1990, 7
    %v1992 = vsub.s32 0, %v1991
    %v1993 = vrot.slane %v1970, %v1992
    %v1995 = vadd.f32 %v1988, %v1993
    %s1996 = scalar_lea.vmem [#allocation11], 2
    %v1997 = vld [vmem:[%s1996] sm:$0x1]
    %s1998 = scalar_lea.vmem [#allocation13], 2
    %v1999 = vld [vmem:[%s1998] sm:$0x1]
    %2000 = vadd.xlane.f32.xlu0 %v1235
    %v2001 = vpop.xlane.xlu0 %2000
    %v2002 = vmul.f32 %v2001, %v1943
    %v2003 = vsub.f32 %v1235, %v2002
    %v2004 = vmul.f32 %v2003, %v2003
    %2005 = vadd.xlane.f32.xlu0 %v2004
    %v2006 = vpop.xlane.xlu0 %2005
    %v2007 = vmul.f32 %v2006, %v1943
    %v2008 = vadd.f32 %v2007, 1e-05
    %v2009 = vrsqrt.pop %v2008
    %v2010 = vmul.f32 %v2003, %v2009
    %v2012 = vlaneseq
    %v2013 = vshrl.u32 %v2012, 7
    %v2014 = vsub.s32 0, %v2013
    %v2015 = vrot.slane %v1997, %v2014
    %v2017 = vmul.f32 %v2010, %v2015
    %v2019 = vlaneseq
    %v2020 = vshrl.u32 %v2019, 7
    %v2021 = vsub.s32 0, %v2020
    %v2022 = vrot.slane %v1999, %v2021
    %v2024 = vadd.f32 %v2017, %v2022
    %v2025 = vld [vmem:[#allocation14] sm:$0xff]
    %v2026 = vld [vmem:[#allocation14 + $0x8] sm:$0xff]
    %v2027 = vld [vmem:[#allocation14 + $0x10] sm:$0xff]
    %v2028 = vld [vmem:[#allocation14 + $0x18] sm:$0xff]
    %v2029 = vld [vmem:[#allocation14 + $0x20] sm:$0xff]
    %v2030 = vld [vmem:[#allocation14 + $0x28] sm:$0xff]
    %v2031 = vld [vmem:[#allocation14 + $0x30] sm:$0xff]
    %v2032 = vld [vmem:[#allocation14 + $0x38] sm:$0xff]
    %v2033 = vld [vmem:[#allocation14 + $0x40] sm:$0xff]
    %v2034 = vld [vmem:[#allocation14 + $0x48] sm:$0xff]
    %v2035 = vld [vmem:[#allocation14 + $0x50] sm:$0xff]
    %v2036 = vld [vmem:[#allocation14 + $0x58] sm:$0xff]
    %v2037 = vld [vmem:[#allocation14 + $0x60] sm:$0xff]
    %v2038 = vld [vmem:[#allocation14 + $0x68] sm:$0xff]
    %v2039 = vld [vmem:[#allocation14 + $0x70] sm:$0xff]
    %v2040 = vld [vmem:[#allocation14 + $0x78] sm:$0xff]
    %v2041 = vld [vmem:[#allocation14 + $0x80] sm:$0xff]
    %v2042 = vld [vmem:[#allocation14 + $0x88] sm:$0xff]
    %v2043 = vld [vmem:[#allocation14 + $0x90] sm:$0xff]
    %v2044 = vld [vmem:[#allocation14 + $0x98] sm:$0xff]
    %v2045 = vld [vmem:[#allocation14 + $0xa0] sm:$0xff]
    %v2046 = vld [vmem:[#allocation14 + $0xa8] sm:$0xff]
    %v2047 = vld [vmem:[#allocation14 + $0xb0] sm:$0xff]
    %v2048 = vld [vmem:[#allocation14 + $0xb8] sm:$0xff]
    %v2049 = vld [vmem:[#allocation14 + $0xc0] sm:$0xff]
    %v2050 = vld [vmem:[#allocation14 + $0xc8] sm:$0xff]
    %v2051 = vld [vmem:[#allocation14 + $0xd0] sm:$0xff]
    %v2052 = vld [vmem:[#allocation14 + $0xd8] sm:$0xff]
    %v2053 = vld [vmem:[#allocation14 + $0xe0] sm:$0xff]
    %v2054 = vld [vmem:[#allocation14 + $0xe8] sm:$0xff]
    %v2055 = vld [vmem:[#allocation14 + $0xf0] sm:$0xff]
    %v2056 = vld [vmem:[#allocation14 + $0xf8] sm:$0xff]
    %v2057 = vld [vmem:[#allocation14 + $0x100] sm:$0xff]
    %v2058 = vld [vmem:[#allocation14 + $0x108] sm:$0xff]
    %v2059 = vld [vmem:[#allocation14 + $0x110] sm:$0xff]
    %v2060 = vld [vmem:[#allocation14 + $0x118] sm:$0xff]
    %v2061 = vld [vmem:[#allocation14 + $0x120] sm:$0xff]
    %v2062 = vld [vmem:[#allocation14 + $0x128] sm:$0xff]
    %v2063 = vld [vmem:[#allocation14 + $0x130] sm:$0xff]
    %v2064 = vld [vmem:[#allocation14 + $0x138] sm:$0xff]
    %v2065 = vld [vmem:[#allocation14 + $0x140] sm:$0xff]
    %v2066 = vld [vmem:[#allocation14 + $0x148] sm:$0xff]
    %v2067 = vld [vmem:[#allocation14 + $0x150] sm:$0xff]
    %v2068 = vld [vmem:[#allocation14 + $0x158] sm:$0xff]
    %v2069 = vld [vmem:[#allocation14 + $0x160] sm:$0xff]
    %v2070 = vld [vmem:[#allocation14 + $0x168] sm:$0xff]
    %v2071 = vld [vmem:[#allocation14 + $0x170] sm:$0xff]
    %v2072 = vld [vmem:[#allocation14 + $0x178] sm:$0xff]
    %v2073 = vld [vmem:[%s9] sm:$0x1]
    %v2075 = vlaneseq
    %v2076 = vshrl.u32 %v2075, 7
    %v2077 = vsub.s32 0, %v2076
    %v2078 = vrot.slane %v2073, %v2077
    %2080 = vmatprep.subr.mxu0 0.0
    %2081 = vmatpush1.msra.mxu0 %v2040
    %2082 = vmatprep.subr.mxu0 0.0
    %2083 = vmatpush1.msra.mxu0 %v2039
    %2084 = vmatprep.subr.mxu0 0.0
    %2085 = vmatpush1.msra.mxu0 %v2038
    %2086 = vmatprep.subr.mxu0 0.0
    %2087 = vmatpush1.msra.mxu0 %v2037
    %2088 = vmatprep.subr.mxu0 0.0
    %2089 = vmatpush1.msra.mxu0 %v2036
    %2090 = vmatprep.subr.mxu0 0.0
    %2091 = vmatpush1.msra.mxu0 %v2035
    %2092 = vmatprep.subr.mxu0 0.0
    %2093 = vmatpush1.msra.mxu0 %v2034
    %2094 = vmatprep.subr.mxu0 0.0
    %2095 = vmatpush1.msra.mxu0 %v2033
    %2096 = vmatprep.subr.mxu0 0.0
    %2097 = vmatpush1.msra.mxu0 %v2032
    %2098 = vmatprep.subr.mxu0 0.0
    %2099 = vmatpush1.msra.mxu0 %v2031
    %2100 = vmatprep.subr.mxu0 0.0
    %2101 = vmatpush1.msra.mxu0 %v2030
    %2102 = vmatprep.subr.mxu0 0.0
    %2103 = vmatpush1.msra.mxu0 %v2029
    %2104 = vmatprep.subr.mxu0 0.0
    %2105 = vmatpush1.msra.mxu0 %v2028
    %2106 = vmatprep.subr.mxu0 0.0
    %2107 = vmatpush1.msra.mxu0 %v2027
    %2108 = vmatprep.subr.mxu0 0.0
    %2109 = vmatpush1.msra.mxu0 %v2026
    %2110 = vmatprep.subr.mxu0 0.0
    %2111 = vmatpush1.msra.mxu0 %v2025
    %2112 = vmatprep.subr.mxu0 0.0
    %2113 = vmatpush2.msra.mxu0 %v2056
    %2114 = vmatprep.subr.mxu0 0.0
    %2115 = vmatpush2.msra.mxu0 %v2055
    %2116 = vmatprep.subr.mxu0 0.0
    %2117 = vmatpush2.msra.mxu0 %v2054
    %2118 = vmatprep.subr.mxu0 0.0
    %2119 = vmatpush2.msra.mxu0 %v2053
    %2120 = vmatprep.subr.mxu0 0.0
    %2121 = vmatpush2.msra.mxu0 %v2052
    %2122 = vmatprep.subr.mxu0 0.0
    %2123 = vmatpush2.msra.mxu0 %v2051
    %2124 = vmatprep.subr.mxu0 0.0
    %2125 = vmatpush2.msra.mxu0 %v2050
    %2126 = vmatprep.subr.mxu0 0.0
    %2127 = vmatpush2.msra.mxu0 %v2049
    %2128 = vmatprep.subr.mxu0 0.0
    %2129 = vmatpush2.msra.mxu0 %v2048
    %2130 = vmatprep.subr.mxu0 0.0
    %2131 = vmatpush2.msra.mxu0 %v2047
    %2132 = vmatprep.subr.mxu0 0.0
    %2133 = vmatpush2.msra.mxu0 %v2046
    %2134 = vmatprep.subr.mxu0 0.0
    %2135 = vmatpush2.msra.mxu0 %v2045
    %2136 = vmatprep.subr.mxu0 0.0
    %2137 = vmatpush2.msra.mxu0 %v2044
    %2138 = vmatprep.subr.mxu0 0.0
    %2139 = vmatpush2.msra.mxu0 %v2043
    %2140 = vmatprep.subr.mxu0 0.0
    %2141 = vmatpush2.msra.mxu0 %v2042
    %2142 = vmatprep.subr.mxu0 0.0
    %2143 = vmatpush2.msra.mxu0 %v2041
    %2144 = vmatprep.mubr.f32.mxu0 %v1995
    %2145 = vmatmul.mubr.f32.gmra.mxu0 %v1966
    %v2146 = vpop.f32.mrf.mxu0
    %v2147 = vadd.f32 %v2078, %v2146
    %v2148 = vpop.f32.mrf.mxu0
    %2149 = vdwg.mxu0
    %2150 = vmatprep.subr.mxu0 0.0
    %2151 = vmatpush1.msra.mxu0 %v2072
    %2152 = vmatprep.subr.mxu0 0.0
    %2153 = vmatpush1.msra.mxu0 %v2071
    %2154 = vmatprep.subr.mxu0 0.0
    %2155 = vmatpush1.msra.mxu0 %v2070
    %2156 = vmatprep.subr.mxu0 0.0
    %2157 = vmatpush1.msra.mxu0 %v2069
    %2158 = vmatprep.subr.mxu0 0.0
    %2159 = vmatpush1.msra.mxu0 %v2068
    %2160 = vmatprep.subr.mxu0 0.0
    %2161 = vmatpush1.msra.mxu0 %v2067
    %2162 = vmatprep.subr.mxu0 0.0
    %2163 = vmatpush1.msra.mxu0 %v2066
    %2164 = vmatprep.subr.mxu0 0.0
    %2165 = vmatpush1.msra.mxu0 %v2065
    %2166 = vmatprep.subr.mxu0 0.0
    %2167 = vmatpush1.msra.mxu0 %v2064
    %2168 = vmatprep.subr.mxu0 0.0
    %2169 = vmatpush1.msra.mxu0 %v2063
    %2170 = vmatprep.subr.mxu0 0.0
    %2171 = vmatpush1.msra.mxu0 %v2062
    %2172 = vmatprep.subr.mxu0 0.0
    %2173 = vmatpush1.msra.mxu0 %v2061
    %2174 = vmatprep.subr.mxu0 0.0
    %2175 = vmatpush1.msra.mxu0 %v2060
    %2176 = vmatprep.subr.mxu0 0.0
    %2177 = vmatpush1.msra.mxu0 %v2059
    %2178 = vmatprep.subr.mxu0 0.0
    %2179 = vmatpush1.msra.mxu0 %v2058
    %2180 = vmatprep.subr.mxu0 0.0
    %2181 = vmatpush1.msra.mxu0 %v2057
    %2182 = vmatprep.subr.mxu0 0.0
    %2183 = vmatpush2.msra.mxu0 0.0
    %2184 = vmatprep.subr.mxu0 0.0
    %2185 = vmatpush2.msra.mxu0 0.0
    %2186 = vmatprep.subr.mxu0 0.0
    %2187 = vmatpush2.msra.mxu0 0.0
    %2188 = vmatprep.subr.mxu0 0.0
    %2189 = vmatpush2.msra.mxu0 0.0
    %2190 = vmatprep.subr.mxu0 0.0
    %2191 = vmatpush2.msra.mxu0 0.0
    %2192 = vmatprep.subr.mxu0 0.0
    %2193 = vmatpush2.msra.mxu0 0.0
    %2194 = vmatprep.subr.mxu0 0.0
    %2195 = vmatpush2.msra.mxu0 0.0
    %2196 = vmatprep.subr.mxu0 0.0
    %2197 = vmatpush2.msra.mxu0 0.0
    %2198 = vmatprep.subr.mxu0 0.0
    %2199 = vmatpush2.msra.mxu0 0.0
    %2200 = vmatprep.subr.mxu0 0.0
    %2201 = vmatpush2.msra.mxu0 0.0
    %2202 = vmatprep.subr.mxu0 0.0
    %2203 = vmatpush2.msra.mxu0 0.0
    %2204 = vmatprep.subr.mxu0 0.0
    %2205 = vmatpush2.msra.mxu0 0.0
    %2206 = vmatprep.subr.mxu0 0.0
    %2207 = vmatpush2.msra.mxu0 0.0
    %2208 = vmatprep.subr.mxu0 0.0
    %2209 = vmatpush2.msra.mxu0 0.0
    %2210 = vmatprep.subr.mxu0 0.0
    %2211 = vmatpush2.msra.mxu0 0.0
    %2212 = vmatprep.subr.mxu0 0.0
    %2213 = vmatpush2.msra.mxu0 0.0
    %2214 = vmatprep.mubr.f32.mxu0 0.0
    %2215 = vmatmul.mubr.f32.gmra.mxu0 %v2024
    %v2216 = vpop.f32.mrf.mxu0
    %v2217 = vadd.f32 %v2147, %v2216
    %v2218 = vpop.f32.mrf.mxu0
    %2219 = vdwg.mxu0
    %v2220 = vmax.f32 %v2217, 0.0
    %v2221 = vld [vmem:[%s10] sm:$0xff]
    %v2222 = vld [vmem:[%s10 + $0x8] sm:$0xff]
    %v2223 = vld [vmem:[%s10 + $0x10] sm:$0xff]
    %v2224 = vld [vmem:[%s10 + $0x18] sm:$0xff]
    %v2225 = vld [vmem:[%s10 + $0x20] sm:$0xff]
    %v2226 = vld [vmem:[%s10 + $0x28] sm:$0xff]
    %v2227 = vld [vmem:[%s10 + $0x30] sm:$0xff]
    %v2228 = vld [vmem:[%s10 + $0x38] sm:$0xff]
    %v2229 = vld [vmem:[%s10 + $0x40] sm:$0xff]
    %v2230 = vld [vmem:[%s10 + $0x48] sm:$0xff]
    %v2231 = vld [vmem:[%s10 + $0x50] sm:$0xff]
    %v2232 = vld [vmem:[%s10 + $0x58] sm:$0xff]
    %v2233 = vld [vmem:[%s10 + $0x60] sm:$0xff]
    %v2234 = vld [vmem:[%s10 + $0x68] sm:$0xff]
    %v2235 = vld [vmem:[%s10 + $0x70] sm:$0xff]
    %v2236 = vld [vmem:[%s10 + $0x78] sm:$0xff]
    %v2237 = vld [vmem:[%s11] sm:$0x1]
    %v2239 = vlaneseq
    %v2240 = vshrl.u32 %v2239, 7
    %v2241 = vsub.s32 0, %v2240
    %v2242 = vrot.slane %v2237, %v2241
    %2244 = vmatprep.subr.mxu0 0.0
    %2245 = vmatpush1.msra.mxu0 %v2236
    %2246 = vmatprep.subr.mxu0 0.0
    %2247 = vmatpush1.msra.mxu0 %v2235
    %2248 = vmatprep.subr.mxu0 0.0
    %2249 = vmatpush1.msra.mxu0 %v2234
    %2250 = vmatprep.subr.mxu0 0.0
    %2251 = vmatpush1.msra.mxu0 %v2233
    %2252 = vmatprep.subr.mxu0 0.0
    %2253 = vmatpush1.msra.mxu0 %v2232
    %2254 = vmatprep.subr.mxu0 0.0
    %2255 = vmatpush1.msra.mxu0 %v2231
    %2256 = vmatprep.subr.mxu0 0.0
    %2257 = vmatpush1.msra.mxu0 %v2230
    %2258 = vmatprep.subr.mxu0 0.0
    %2259 = vmatpush1.msra.mxu0 %v2229
    %2260 = vmatprep.subr.mxu0 0.0
    %2261 = vmatpush1.msra.mxu0 %v2228
    %2262 = vmatprep.subr.mxu0 0.0
    %2263 = vmatpush1.msra.mxu0 %v2227
    %2264 = vmatprep.subr.mxu0 0.0
    %2265 = vmatpush1.msra.mxu0 %v2226
    %2266 = vmatprep.subr.mxu0 0.0
    %2267 = vmatpush1.msra.mxu0 %v2225
    %2268 = vmatprep.subr.mxu0 0.0
    %2269 = vmatpush1.msra.mxu0 %v2224
    %2270 = vmatprep.subr.mxu0 0.0
    %2271 = vmatpush1.msra.mxu0 %v2223
    %2272 = vmatprep.subr.mxu0 0.0
    %2273 = vmatpush1.msra.mxu0 %v2222
    %2274 = vmatprep.subr.mxu0 0.0
    %2275 = vmatpush1.msra.mxu0 %v2221
    %2276 = vmatprep.subr.mxu0 0.0
    %2277 = vmatpush2.msra.mxu0 0.0
    %2278 = vmatprep.subr.mxu0 0.0
    %2279 = vmatpush2.msra.mxu0 0.0
    %2280 = vmatprep.subr.mxu0 0.0
    %2281 = vmatpush2.msra.mxu0 0.0
    %2282 = vmatprep.subr.mxu0 0.0
    %2283 = vmatpush2.msra.mxu0 0.0
    %2284 = vmatprep.subr.mxu0 0.0
    %2285 = vmatpush2.msra.mxu0 0.0
    %2286 = vmatprep.subr.mxu0 0.0
    %2287 = vmatpush2.msra.mxu0 0.0
    %2288 = vmatprep.subr.mxu0 0.0
    %2289 = vmatpush2.msra.mxu0 0.0
    %2290 = vmatprep.subr.mxu0 0.0
    %2291 = vmatpush2.msra.mxu0 0.0
    %2292 = vmatprep.subr.mxu0 0.0
    %2293 = vmatpush2.msra.mxu0 0.0
    %2294 = vmatprep.subr.mxu0 0.0
    %2295 = vmatpush2.msra.mxu0 0.0
    %2296 = vmatprep.subr.mxu0 0.0
    %2297 = vmatpush2.msra.mxu0 0.0
    %2298 = vmatprep.subr.mxu0 0.0
    %2299 = vmatpush2.msra.mxu0 0.0
    %2300 = vmatprep.subr.mxu0 0.0
    %2301 = vmatpush2.msra.mxu0 0.0
    %2302 = vmatprep.subr.mxu0 0.0
    %2303 = vmatpush2.msra.mxu0 0.0
    %2304 = vmatprep.subr.mxu0 0.0
    %2305 = vmatpush2.msra.mxu0 0.0
    %2306 = vmatprep.subr.mxu0 0.0
    %2307 = vmatpush2.msra.mxu0 0.0
    %2308 = vmatprep.mubr.f32.mxu0 0.0
    %2309 = vmatmul.mubr.f32.gmra.mxu0 %v2220
    %v2310 = vpop.f32.mrf.mxu0
    %v2311 = vadd.f32 %v2242, %v2310
    %v2312 = vpop.f32.mrf.mxu0
    %2313 = vdwg.mxu0
    %v2314 = vmax.f32 %v2311, 0.0
    %v2315 = vld [vmem:[#allocation16] sm:$0xff]
    %v2316 = vld [vmem:[#allocation16 + $0x8] sm:$0xff]
    %v2317 = vld [vmem:[#allocation16 + $0x10] sm:$0xff]
    %v2318 = vld [vmem:[#allocation16 + $0x18] sm:$0xff]
    %v2319 = vld [vmem:[#allocation16 + $0x20] sm:$0xff]
    %v2320 = vld [vmem:[#allocation16 + $0x28] sm:$0xff]
    %v2321 = vld [vmem:[#allocation16 + $0x30] sm:$0xff]
    %v2322 = vld [vmem:[#allocation16 + $0x38] sm:$0xff]
    %v2323 = vld [vmem:[#allocation16 + $0x40] sm:$0xff]
    %v2324 = vld [vmem:[#allocation16 + $0x48] sm:$0xff]
    %v2325 = vld [vmem:[#allocation16 + $0x50] sm:$0xff]
    %v2326 = vld [vmem:[#allocation16 + $0x58] sm:$0xff]
    %v2327 = vld [vmem:[#allocation16 + $0x60] sm:$0xff]
    %v2328 = vld [vmem:[#allocation16 + $0x68] sm:$0xff]
    %v2329 = vld [vmem:[#allocation16 + $0x70] sm:$0xff]
    %v2330 = vld [vmem:[#allocation16 + $0x78] sm:$0xff]
    %v2331 = vld [vmem:[#allocation17] sm:$0x1]
    %v2333 = vlaneseq
    %v2334 = vshrl.u32 %v2333, 7
    %v2335 = vsub.s32 0, %v2334
    %v2336 = vrot.slane %v2331, %v2335
    %2338 = vmatprep.subr.mxu0 0.0
    %2339 = vmatpush1.msra.mxu0 %v2330
    %2340 = vmatprep.subr.mxu0 0.0
    %2341 = vmatpush1.msra.mxu0 %v2329
    %2342 = vmatprep.subr.mxu0 0.0
    %2343 = vmatpush1.msra.mxu0 %v2328
    %2344 = vmatprep.subr.mxu0 0.0
    %2345 = vmatpush1.msra.mxu0 %v2327
    %2346 = vmatprep.subr.mxu0 0.0
    %2347 = vmatpush1.msra.mxu0 %v2326
    %2348 = vmatprep.subr.mxu0 0.0
    %2349 = vmatpush1.msra.mxu0 %v2325
    %2350 = vmatprep.subr.mxu0 0.0
    %2351 = vmatpush1.msra.mxu0 %v2324
    %2352 = vmatprep.subr.mxu0 0.0
    %2353 = vmatpush1.msra.mxu0 %v2323
    %2354 = vmatprep.subr.mxu0 0.0
    %2355 = vmatpush1.msra.mxu0 %v2322
    %2356 = vmatprep.subr.mxu0 0.0
    %2357 = vmatpush1.msra.mxu0 %v2321
    %2358 = vmatprep.subr.mxu0 0.0
    %2359 = vmatpush1.msra.mxu0 %v2320
    %2360 = vmatprep.subr.mxu0 0.0
    %2361 = vmatpush1.msra.mxu0 %v2319
    %2362 = vmatprep.subr.mxu0 0.0
    %2363 = vmatpush1.msra.mxu0 %v2318
    %2364 = vmatprep.subr.mxu0 0.0
    %2365 = vmatpush1.msra.mxu0 %v2317
    %2366 = vmatprep.subr.mxu0 0.0
    %2367 = vmatpush1.msra.mxu0 %v2316
    %2368 = vmatprep.subr.mxu0 0.0
    %2369 = vmatpush1.msra.mxu0 %v2315
    %2370 = vmatprep.subr.mxu0 0.0
    %2371 = vmatpush2.msra.mxu0 0.0
    %2372 = vmatprep.subr.mxu0 0.0
    %2373 = vmatpush2.msra.mxu0 0.0
    %2374 = vmatprep.subr.mxu0 0.0
    %2375 = vmatpush2.msra.mxu0 0.0
    %2376 = vmatprep.subr.mxu0 0.0
    %2377 = vmatpush2.msra.mxu0 0.0
    %2378 = vmatprep.subr.mxu0 0.0
    %2379 = vmatpush2.msra.mxu0 0.0
    %2380 = vmatprep.subr.mxu0 0.0
    %2381 = vmatpush2.msra.mxu0 0.0
    %2382 = vmatprep.subr.mxu0 0.0
    %2383 = vmatpush2.msra.mxu0 0.0
    %2384 = vmatprep.subr.mxu0 0.0
    %2385 = vmatpush2.msra.mxu0 0.0
    %2386 = vmatprep.subr.mxu0 0.0
    %2387 = vmatpush2.msra.mxu0 0.0
    %2388 = vmatprep.subr.mxu0 0.0
    %2389 = vmatpush2.msra.mxu0 0.0
    %2390 = vmatprep.subr.mxu0 0.0
    %2391 = vmatpush2.msra.mxu0 0.0
    %2392 = vmatprep.subr.mxu0 0.0
    %2393 = vmatpush2.msra.mxu0 0.0
    %2394 = vmatprep.subr.mxu0 0.0
    %2395 = vmatpush2.msra.mxu0 0.0
    %2396 = vmatprep.subr.mxu0 0.0
    %2397 = vmatpush2.msra.mxu0 0.0
    %2398 = vmatprep.subr.mxu0 0.0
    %2399 = vmatpush2.msra.mxu0 0.0
    %2400 = vmatprep.subr.mxu0 0.0
    %2401 = vmatpush2.msra.mxu0 0.0
    %2402 = vmatprep.mubr.f32.mxu0 0.0
    %2403 = vmatmul.mubr.f32.gmra.mxu0 %v2314
    %v2404 = vpop.f32.mrf.mxu0
    %v2405 = vadd.f32 %v2336, %v2404
    %v2406 = vpop.f32.mrf.mxu0
    %2407 = vdwg.mxu0
    %2408 = vst [vmem:[%s14] sm:$0xff] %v2405
    // Predicated region
    $region105: #{emoreact_forward.1} parent=1 // pred_check
      _
    $region106: #{emoreact_forward.1} parent=1 // pred_check_branch
      %2410 = sbr.rel (0) target = $region108
    $region107: #{emoreact_forward.1} parent=1 // pred_region
      _
    $region108: #{emoreact_forward.1} parent=1 // pred_fallthru
      _
    // Predicated region
    $region109: #{emoreact_forward.1} parent=1 // pred_check
      _
    $region110: #{emoreact_forward.1} parent=1 // pred_check_branch
      %2412 = sbr.rel (0) target = $region112
    $region111: #{emoreact_forward.1} parent=1 // pred_region
      _
    $region112: #{emoreact_forward.1} parent=1 // pred_fallthru
      _
    %2413 = vsyncpa [#allocation4], 1
    %2414 = vsyncpa [#allocation6], 1
    %2415 = vsyncpa [#allocation9], 1
    %2416 = vsyncpa [#allocation12], 1
    %2417 = vsyncpa [#allocation15], 1
    %2418 = vsyncpa [#allocation18], 1

</llo_original>
